<compile_context>
chip_gen: v5e
topology: v5e:2x2
jax: 0.10.0
libtpu: 0.0.40
codegen_flags: <defaults>
</compile_context>

<pallas_src>
import jax
import jax.numpy as jnp
from jax.experimental import pallas as pl
from jax.experimental.pallas import tpu as pltpu

IN_FEATURES = 784
K_PAD = 896          # 7 * 128, lane-aligned K for the first matmul
H1, H2, N_OUT = 128, 64, 10


def mlp_kernel(x_ref, w1_ref, b1_ref, w2_ref, b2_ref, w3_ref, b3_ref, o_ref):
    # fc1: [TILE_B, 896](bf16) @ [896, 128](bf16) -> f32, + b1 (f32)
    h1 = jnp.dot(x_ref[...], w1_ref[...], preferred_element_type=jnp.float32)
    h1 = h1 + b1_ref[...]

    # hidden2: bf16 inputs, f32 accumulate, + b2
    h2 = jnp.dot(h1.astype(jnp.bfloat16), w2_ref[...],
                 preferred_element_type=jnp.float32)
    h2 = h2 + b2_ref[...]

    # relu(relu(.)) == relu(.)
    h2 = jnp.maximum(h2, 0.0)

    # output: bf16 inputs, f32 accumulate, + b3
    logits = jnp.dot(h2.astype(jnp.bfloat16), w3_ref[...],
                     preferred_element_type=jnp.float32)
    logits = logits + b3_ref[...]

    # Numerically-stable softmax over the class dim (f32 throughout).
    m = jnp.max(logits, axis=1, keepdims=True)
    e = jnp.exp(logits - m)
    denom = jnp.sum(e, axis=1, keepdims=True)
    o_ref[...] = e * pl.reciprocal(denom, approx=False)


def network_forward(x, w1, b1, w2, b2, w3, b3, *, tile_b=128):
    """x: [B, 784] f32.  Weights stored [in, out]; w1 pre-padded to [896, 128],
    w1/w2/w3 in bf16, biases [1, out] in f32."""
    B = x.shape[0]

    # Pad feature dim to the lane-aligned K and cast the activation to bf16.
    x = jnp.pad(x, ((0, 0), (0, K_PAD - x.shape[1])))
    x = x.astype(jnp.bfloat16)

    # Pad batch up to a multiple of the batch tile (padded rows sliced off).
    n_blocks = pl.cdiv(B, tile_b)
    b_pad = n_blocks * tile_b
    if b_pad != B:
        x = jnp.pad(x, ((0, b_pad - B), (0, 0)))

    flops = 2 * b_pad * (K_PAD * H1 + H1 * H2 + H2 * N_OUT)
    bytes_accessed = (
        x.size * 2
        + (w1.size + w2.size + w3.size) * 2
        + (b1.size + b2.size + b3.size) * 4
        + b_pad * N_OUT * 4
    )

    weight_spec = lambda shape: pl.BlockSpec(shape, lambda i: (0, 0))

    out = pl.pallas_call(
        mlp_kernel,
        out_shape=jax.ShapeDtypeStruct((b_pad, N_OUT), jnp.float32),
        grid=(n_blocks,),
        in_specs=[
            pl.BlockSpec((tile_b, K_PAD), lambda i: (i, 0)),   # x: batch-tiled
            weight_spec(w1.shape), weight_spec(b1.shape),      # resident
            weight_spec(w2.shape), weight_spec(b2.shape),
            weight_spec(w3.shape), weight_spec(b3.shape),
        ],
        out_specs=pl.BlockSpec((tile_b, N_OUT), lambda i: (i, 0)),
        compiler_params=pltpu.CompilerParams(
            dimension_semantics=("parallel",),
        ),
        cost_estimate=pl.CostEstimate(
            flops=flops,
            transcendentals=b_pad * N_OUT,
            bytes_accessed=bytes_accessed,
        ),
    )(x, w1, b1, w2, b2, w3, b3)

    return out[:B]


def init_params(key):
    # Same shapes as the PyTorch module, stored [in, out] so the kernel does
    # x @ W + b.  Weights in bf16 (MXU inputs), biases in f32; w1 zero-padded
    # along K to 896 so the padded x columns contribute exactly zero.
    k1, k2, k3, k4, k5, k6 = jax.random.split(key, 6)
    w1 = jax.random.normal(k1, (IN_FEATURES, H1), jnp.float32) * 0.05
    b1 = jax.random.normal(k2, (1, H1), jnp.float32) * 0.05
    w2 = jax.random.normal(k3, (H1, H2), jnp.float32) * 0.05
    b2 = jax.random.normal(k4, (1, H2), jnp.float32) * 0.05
    w3 = jax.random.normal(k5, (H2, N_OUT), jnp.float32) * 0.05
    b3 = jax.random.normal(k6, (1, N_OUT), jnp.float32) * 0.05

    w1 = jnp.pad(w1, ((0, K_PAD - IN_FEATURES), (0, 0))).astype(jnp.bfloat16)
    w2 = w2.astype(jnp.bfloat16)
    w3 = w3.astype(jnp.bfloat16)
    return w1, b1, w2, b2, w3, b3


if __name__ == "__main__":
    key = jax.random.PRNGKey(0)
    kx, kp = jax.random.split(key)

    # B=256 with TILE_B=128 exercises a 2-step batch grid (weights resident,
    # x pipelined).  Production should raise TILE_B to 256-512 on v6e/v7x.
    B = 256
    x = jax.random.normal(kx, (B, IN_FEATURES), jnp.float32)
    params = init_params(kp)

    out = network_forward(x, *params, tile_b=128)
    out = jax.block_until_ready(out)

    # Plain-JAX reference with the same bf16-input / f32-accumulate math.
    w1, b1, w2, b2, w3, b3 = params
    xp = jnp.pad(x, ((0, 0), (0, K_PAD - IN_FEATURES))).astype(jnp.bfloat16)
    h1 = jnp.dot(xp, w1, preferred_element_type=jnp.float32) + b1
    h2 = jnp.dot(h1.astype(jnp.bfloat16), w2,
                 preferred_element_type=jnp.float32) + b2
    h2 = jnp.maximum(h2, 0.0)
    logits = jnp.dot(h2.astype(jnp.bfloat16), w3,
                     preferred_element_type=jnp.float32) + b3
    ref = jax.nn.softmax(logits, axis=1)

    assert out.shape == (B, N_OUT)
    assert jnp.allclose(out, ref, atol=2e-3, rtol=2e-3)
    assert jnp.allclose(jnp.sum(out, axis=1), 1.0, atol=1e-4)

    print("KERNEL_OK")
</pallas_src>

<mosaic_0001>
module attributes {stable_mosaic.version = 11 : i64} {
  func.func @mlp_kernel(%arg0: i32, %arg1: memref<128x896xbf16, #tpu.memory_space<vmem>>, %arg2: memref<896x128xbf16, #tpu.memory_space<vmem>>, %arg3: memref<1x128xf32, #tpu.memory_space<vmem>>, %arg4: memref<128x64xbf16, #tpu.memory_space<vmem>>, %arg5: memref<1x64xf32, #tpu.memory_space<vmem>>, %arg6: memref<64x10xbf16, #tpu.memory_space<vmem>>, %arg7: memref<1x10xf32, #tpu.memory_space<vmem>>, %arg8: memref<128x10xf32, #tpu.memory_space<vmem>>) attributes {dimension_semantics = [#tpu.dimension_semantics<parallel>], iteration_bounds = array<i64: 2>, scalar_prefetch = 0 : i64, scratch_operands = 0 : i64, tpu.core_type = #tpu.core_type<tc>, window_params = [{transform_indices = @transform_0, window_bounds = array<i64: 128, 896>}, {pipeline_mode = #tpu.pipeline_mode<synchronous>, transform_indices = @transform_1, window_bounds = array<i64: 896, 128>}, {pipeline_mode = #tpu.pipeline_mode<synchronous>, transform_indices = @transform_2, window_bounds = array<i64: 1, 128>}, {pipeline_mode = #tpu.pipeline_mode<synchronous>, transform_indices = @transform_3, window_bounds = array<i64: 128, 64>}, {pipeline_mode = #tpu.pipeline_mode<synchronous>, transform_indices = @transform_4, window_bounds = array<i64: 1, 64>}, {pipeline_mode = #tpu.pipeline_mode<synchronous>, transform_indices = @transform_5, window_bounds = array<i64: 64, 10>}, {pipeline_mode = #tpu.pipeline_mode<synchronous>, transform_indices = @transform_6, window_bounds = array<i64: 1, 10>}, {transform_indices = @transform_7, window_bounds = array<i64: 128, 10>}]} {
    %c0 = arith.constant 0 : index
    %c0_0 = arith.constant 0 : index
    %0 = vector.load %arg1[%c0, %c0_0] : memref<128x896xbf16, #tpu.memory_space<vmem>>, vector<128x896xbf16>
    %c0_1 = arith.constant 0 : index
    %c0_2 = arith.constant 0 : index
    %1 = vector.load %arg2[%c0_1, %c0_2] : memref<896x128xbf16, #tpu.memory_space<vmem>>, vector<896x128xbf16>
    %cst = arith.constant dense<0.000000e+00> : vector<128x128xf32>
    %2 = tpu.matmul %0, %1, %cst {dimension_numbers = #tpu.dot_dimension_numbers<[1], [0], [0], [1], [0, 0, 1, 1], [], []>} : vector<128x896xbf16>, vector<896x128xbf16>, vector<128x128xf32> -> vector<128x128xf32>
    %c0_3 = arith.constant 0 : index
    %c0_4 = arith.constant 0 : index
    %3 = vector.load %arg3[%c0_3, %c0_4] : memref<1x128xf32, #tpu.memory_space<vmem>>, vector<1x128xf32>
    %4 = vector.broadcast %3 : vector<1x128xf32> to vector<128x128xf32>
    %5 = arith.addf %2, %4 : vector<128x128xf32>
    %6 = arith.truncf %5 : vector<128x128xf32> to vector<128x128xbf16>
    %c0_5 = arith.constant 0 : index
    %c0_6 = arith.constant 0 : index
    %7 = vector.load %arg4[%c0_5, %c0_6] : memref<128x64xbf16, #tpu.memory_space<vmem>>, vector<128x64xbf16>
    %cst_7 = arith.constant dense<0.000000e+00> : vector<128x64xf32>
    %8 = tpu.matmul %6, %7, %cst_7 {dimension_numbers = #tpu.dot_dimension_numbers<[1], [0], [0], [1], [0, 0, 1, 1], [], []>} : vector<128x128xbf16>, vector<128x64xbf16>, vector<128x64xf32> -> vector<128x64xf32>
    %c0_8 = arith.constant 0 : index
    %c0_9 = arith.constant 0 : index
    %9 = vector.load %arg5[%c0_8, %c0_9] : memref<1x64xf32, #tpu.memory_space<vmem>>, vector<1x64xf32>
    %10 = vector.broadcast %9 : vector<1x64xf32> to vector<128x64xf32>
    %11 = arith.addf %8, %10 : vector<128x64xf32>
    %cst_10 = arith.constant 0.000000e+00 : f32
    %12 = vector.broadcast %cst_10 : f32 to vector<128x64xf32>
    %13 = arith.maximumf %11, %12 : vector<128x64xf32>
    %14 = arith.truncf %13 : vector<128x64xf32> to vector<128x64xbf16>
    %c0_11 = arith.constant 0 : index
    %c0_12 = arith.constant 0 : index
    %15 = vector.load %arg6[%c0_11, %c0_12] : memref<64x10xbf16, #tpu.memory_space<vmem>>, vector<64x10xbf16>
    %cst_13 = arith.constant dense<0.000000e+00> : vector<128x10xf32>
    %16 = tpu.matmul %14, %15, %cst_13 {dimension_numbers = #tpu.dot_dimension_numbers<[1], [0], [0], [1], [0, 0, 1, 1], [], []>} : vector<128x64xbf16>, vector<64x10xbf16>, vector<128x10xf32> -> vector<128x10xf32>
    %c0_14 = arith.constant 0 : index
    %c0_15 = arith.constant 0 : index
    %17 = vector.load %arg7[%c0_14, %c0_15] : memref<1x10xf32, #tpu.memory_space<vmem>>, vector<1x10xf32>
    %18 = vector.broadcast %17 : vector<1x10xf32> to vector<128x10xf32>
    %19 = arith.addf %16, %18 : vector<128x10xf32>
    %cst_16 = arith.constant dense<0xFF800000> : vector<128xf32>
    %20 = vector.multi_reduction <maximumf>, %19, %cst_16 [1] : vector<128x10xf32> to vector<128xf32>
    %21 = vector.shape_cast %20 : vector<128xf32> to vector<128x1xf32>
    %22 = vector.broadcast %21 : vector<128x1xf32> to vector<128x10xf32>
    %23 = arith.subf %19, %22 : vector<128x10xf32>
    %24 = math.exp %23 : vector<128x10xf32>
    %cst_17 = arith.constant dense<0.000000e+00> : vector<128xf32>
    %25 = vector.multi_reduction <add>, %24, %cst_17 [1] : vector<128x10xf32> to vector<128xf32>
    %26 = vector.shape_cast %25 : vector<128xf32> to vector<128x1xf32>
    %27 = tpu.reciprocal %26 : vector<128x1xf32> -> vector<128x1xf32>
    %28 = vector.broadcast %27 : vector<128x1xf32> to vector<128x10xf32>
    %29 = arith.mulf %24, %28 : vector<128x10xf32>
    %c0_18 = arith.constant 0 : index
    %c0_19 = arith.constant 0 : index
    %30 = vector.load %arg8[%c0_18, %c0_19] : memref<128x10xf32, #tpu.memory_space<vmem>>, vector<128x10xf32>
    tpu.vector_store %arg8[%c0_18, %c0_19], %29 {strides = array<i32>} : memref<128x10xf32, #tpu.memory_space<vmem>>, vector<128x10xf32>,
    return
  }
  func.func @transform_0(%arg0: i32) -> (i32, i32) {
    %c0_i32 = arith.constant 0 : i32
    %c0_i32_0 = arith.constant 0 : i32
    return %arg0, %c0_i32 : i32, i32
  }
  func.func @transform_1(%arg0: i32) -> (i32, i32) {
    %c0_i32 = arith.constant 0 : i32
    %c0_i32_0 = arith.constant 0 : i32
    %c0_i32_1 = arith.constant 0 : i32
    return %c0_i32, %c0_i32_0 : i32, i32
  }
  func.func @transform_2(%arg0: i32) -> (i32, i32) {
    %c0_i32 = arith.constant 0 : i32
    %c0_i32_0 = arith.constant 0 : i32
    %c0_i32_1 = arith.constant 0 : i32
    return %c0_i32, %c0_i32_0 : i32, i32
  }
  func.func @transform_3(%arg0: i32) -> (i32, i32) {
    %c0_i32 = arith.constant 0 : i32
    %c0_i32_0 = arith.constant 0 : i32
    %c0_i32_1 = arith.constant 0 : i32
    return %c0_i32, %c0_i32_0 : i32, i32
  }
  func.func @transform_4(%arg0: i32) -> (i32, i32) {
    %c0_i32 = arith.constant 0 : i32
    %c0_i32_0 = arith.constant 0 : i32
    %c0_i32_1 = arith.constant 0 : i32
    return %c0_i32, %c0_i32_0 : i32, i32
  }
  func.func @transform_5(%arg0: i32) -> (i32, i32) {
    %c0_i32 = arith.constant 0 : i32
    %c0_i32_0 = arith.constant 0 : i32
    %c0_i32_1 = arith.constant 0 : i32
    return %c0_i32, %c0_i32_0 : i32, i32
  }
  func.func @transform_6(%arg0: i32) -> (i32, i32) {
    %c0_i32 = arith.constant 0 : i32
    %c0_i32_0 = arith.constant 0 : i32
    %c0_i32_1 = arith.constant 0 : i32
    return %c0_i32, %c0_i32_0 : i32, i32
  }
  func.func @transform_7(%arg0: i32) -> (i32, i32) {
    %c0_i32 = arith.constant 0 : i32
    %c0_i32_0 = arith.constant 0 : i32
    return %arg0, %c0_i32 : i32, i32
  }
}

</mosaic_0001>

<llo_original>
// kernel: tpu_custom_call.1
$region0: #{tpu_custom_call.1}
  #allocation0 [shape = 'u32[]', space=smem, size = 0x4, offset = 0x4, fixed_abs, tag = 'smem constant byte address 0x4 - core index']
  #allocation1 [shape = 'u32[72,128]{1,0:T(1,128)}', space=vmem, size = 0x9000, scoped, tag = 'internal scratch']
  %s0 = inlined_call_operand.hbm [shape: bf16[256,896], index: 0, kind: input, shape index: {}]
  %s1 = inlined_call_operand.hbm [shape: bf16[896,128], index: 1, kind: input, shape index: {}]
  %s2 = inlined_call_operand.vmem [shape: f32[1,128], index: 2, kind: input, shape index: {}]
  %s3 = inlined_call_operand.vmem [shape: bf16[128,64], index: 3, kind: input, shape index: {}]
  %s4 = inlined_call_operand.vmem [shape: f32[1,64], index: 4, kind: input, shape index: {}]
  %s5 = inlined_call_operand.vmem [shape: bf16[64,10], index: 5, kind: input, shape index: {}]
  %s6 = inlined_call_operand.vmem [shape: f32[1,10], index: 6, kind: input, shape index: {}]
  %s7 = inlined_call_operand.vmem [shape: f32[256,10], index: 7, kind: output, shape index: {}]
  %s8 = sld [smem:[#allocation0]]
  $region69: #{tpu_custom_call.1} parent=0
    _
  %s10 = ssub.s32 1, %s8
  %s11 = scalar_select 0, %s10, %s8
  $region1: #{tpu_custom_call.1} parent=0
    #allocation2 [shape = 'u8[458752]{0}', space=vmem, size = 0x70000, scoped, tag = 'input window, operand 0']
    #allocation3 [shape = 's32[2]{0}', space=sflag, size = 0x8, scoped, tag = 'scoped memory for tpu_custom_call.1']
    #allocation4 [shape = 'u8[229376]{0}', space=vmem, size = 0x38000, scoped, tag = 'input window, operand 1, single buffered']
    #allocation5 [shape = 's32[1]{0}', space=sflag, size = 0x4, scoped, tag = 'scoped memory for tpu_custom_call.1']
    %12 = vsyncpa [#allocation3], 0
    %s13 = scalar_lea.sflag [#allocation3], 1
    %14 = vsyncpa %s13, 0
    %15 = vsyncpa [#allocation5], 0
    loop: start=0, step=1, limit=4
    $region2: #{tpu_custom_call.1} parent=1 // loop_pre_header
      _
    $region3: #{tpu_custom_call.1} parent=1 // loop_header
      %s17 = sphi 0, %s21
      %p18 = scmp.ge.s32.totalorder %s17, 4
      %s27 = sphi 0, %s29
      %s30 = sphi 0, %s27
      %s31 = sphi 0, %s30
      %s47 = sphi 0, %s31
      %s51 = sphi 0, %s51
      %s53 = sphi 0, %s51
      %s54 = sphi 0, %s53
      %s68 = sphi 0, %s54
      %s72 = sphi 0, %s72
      %s74 = sphi 0, %s72
      %s75 = sphi 0, %s74
      %s89 = sphi 0, %s75
      %s93 = sphi 0, %s93
      %s95 = sphi 0, %s93
      %s96 = sphi 0, %s95
      %s110 = sphi 0, %s96
      %s114 = sphi 0, %s114
      %s116 = sphi 0, %s114
      %s117 = sphi 0, %s116
      %s131 = sphi 0, %s117
      %s135 = sphi 0, %s135
      %s137 = sphi 0, %s135
      %s138 = sphi 0, %s137
      %s152 = sphi 0, %s138
      %s156 = sphi 0, %s156
      %s158 = sphi 0, %s156
      %s159 = sphi 0, %s158
      %s173 = sphi 0, %s159
      %s179 = sphi 0, %s181
      %s182 = sphi 0, %s179
      %s183 = sphi 0, %s182
      %s199 = sphi 0, %s183
    $region4: #{tpu_custom_call.1} parent=1 // loop_header_branch
      %20 = sbr.rel (%p18) target = $region8
    $region5: #{tpu_custom_call.1} parent=1 // loop_body
      %s22 = ssub.s32 %s17, 1
      %s23 = ssub.s32 %s17, 2
      %s24 = sadd.s32 %s17, 1
      %s25 = ssub.s32 %s17, %s24
      %p26 = scmp.eq.s32.totalorder %s25, 0
      %s28 = sadd.s32 %s27, 1
      %s29 = scalar_select %p26, %s27, %s28
      %p32 = pneg %p26
      %p33 = scmp.eq.s32.totalorder %s17, 1
      %p34 = por %p32, %p33
      %p35 = scmp.ne.s32.totalorder %s27, %s30
      %p36 = scmp.eq.s32.totalorder %s17, 0
      %p37 = por %p35, %p36
      %p38 = scmp.ne.s32.totalorder %s27, %s30
      %p39 = scmp.eq.s32.totalorder %s22, 1
      %p40 = por %p38, %p39
      %p41 = scmp.ne.s32.totalorder %s30, %s31
      %p42 = scmp.eq.s32.totalorder %s22, 0
      %p43 = por %p41, %p42
      %p44 = scmp.ne.s32.totalorder %s30, %s31
      %p45 = scmp.eq.s32.totalorder %s23, 1
      %p46 = por %p44, %p45
      %p48 = scmp.ne.s32.totalorder %s31, %s47
      %p49 = scmp.eq.s32.totalorder %s23, 0
      %p50 = por %p48, %p49
      %s52 = sadd.s32 %s51, 1
      %p55 = scmp.eq.s32.totalorder %s17, 1
      %p56 = scmp.ne.s32.totalorder %s51, %s53
      %p57 = scmp.eq.s32.totalorder %s17, 0
      %p58 = por %p56, %p57
      %p59 = scmp.ne.s32.totalorder %s51, %s53
      %p60 = scmp.eq.s32.totalorder %s22, 1
      %p61 = por %p59, %p60
      %p62 = scmp.ne.s32.totalorder %s53, %s54
      %p63 = scmp.eq.s32.totalorder %s22, 0
      %p64 = por %p62, %p63
      %p65 = scmp.ne.s32.totalorder %s53, %s54
      %p66 = scmp.eq.s32.totalorder %s23, 1
      %p67 = por %p65, %p66
      %p69 = scmp.ne.s32.totalorder %s54, %s68
      %p70 = scmp.eq.s32.totalorder %s23, 0
      %p71 = por %p69, %p70
      %s73 = sadd.s32 %s72, 1
      %p76 = scmp.eq.s32.totalorder %s17, 1
      %p77 = scmp.ne.s32.totalorder %s72, %s74
      %p78 = scmp.eq.s32.totalorder %s17, 0
      %p79 = por %p77, %p78
      %p80 = scmp.ne.s32.totalorder %s72, %s74
      %p81 = scmp.eq.s32.totalorder %s22, 1
      %p82 = por %p80, %p81
      %p83 = scmp.ne.s32.totalorder %s74, %s75
      %p84 = scmp.eq.s32.totalorder %s22, 0
      %p85 = por %p83, %p84
      %p86 = scmp.ne.s32.totalorder %s74, %s75
      %p87 = scmp.eq.s32.totalorder %s23, 1
      %p88 = por %p86, %p87
      %p90 = scmp.ne.s32.totalorder %s75, %s89
      %p91 = scmp.eq.s32.totalorder %s23, 0
      %p92 = por %p90, %p91
      %s94 = sadd.s32 %s93, 1
      %p97 = scmp.eq.s32.totalorder %s17, 1
      %p98 = scmp.ne.s32.totalorder %s93, %s95
      %p99 = scmp.eq.s32.totalorder %s17, 0
      %p100 = por %p98, %p99
      %p101 = scmp.ne.s32.totalorder %s93, %s95
      %p102 = scmp.eq.s32.totalorder %s22, 1
      %p103 = por %p101, %p102
      %p104 = scmp.ne.s32.totalorder %s95, %s96
      %p105 = scmp.eq.s32.totalorder %s22, 0
      %p106 = por %p104, %p105
      %p107 = scmp.ne.s32.totalorder %s95, %s96
      %p108 = scmp.eq.s32.totalorder %s23, 1
      %p109 = por %p107, %p108
      %p111 = scmp.ne.s32.totalorder %s96, %s110
      %p112 = scmp.eq.s32.totalorder %s23, 0
      %p113 = por %p111, %p112
      %s115 = sadd.s32 %s114, 1
      %p118 = scmp.eq.s32.totalorder %s17, 1
      %p119 = scmp.ne.s32.totalorder %s114, %s116
      %p120 = scmp.eq.s32.totalorder %s17, 0
      %p121 = por %p119, %p120
      %p122 = scmp.ne.s32.totalorder %s114, %s116
      %p123 = scmp.eq.s32.totalorder %s22, 1
      %p124 = por %p122, %p123
      %p125 = scmp.ne.s32.totalorder %s116, %s117
      %p126 = scmp.eq.s32.totalorder %s22, 0
      %p127 = por %p125, %p126
      %p128 = scmp.ne.s32.totalorder %s116, %s117
      %p129 = scmp.eq.s32.totalorder %s23, 1
      %p130 = por %p128, %p129
      %p132 = scmp.ne.s32.totalorder %s117, %s131
      %p133 = scmp.eq.s32.totalorder %s23, 0
      %p134 = por %p132, %p133
      %s136 = sadd.s32 %s135, 1
      %p139 = scmp.eq.s32.totalorder %s17, 1
      %p140 = scmp.ne.s32.totalorder %s135, %s137
      %p141 = scmp.eq.s32.totalorder %s17, 0
      %p142 = por %p140, %p141
      %p143 = scmp.ne.s32.totalorder %s135, %s137
      %p144 = scmp.eq.s32.totalorder %s22, 1
      %p145 = por %p143, %p144
      %p146 = scmp.ne.s32.totalorder %s137, %s138
      %p147 = scmp.eq.s32.totalorder %s22, 0
      %p148 = por %p146, %p147
      %p149 = scmp.ne.s32.totalorder %s137, %s138
      %p150 = scmp.eq.s32.totalorder %s23, 1
      %p151 = por %p149, %p150
      %p153 = scmp.ne.s32.totalorder %s138, %s152
      %p154 = scmp.eq.s32.totalorder %s23, 0
      %p155 = por %p153, %p154
      %s157 = sadd.s32 %s156, 1
      %p160 = scmp.eq.s32.totalorder %s17, 1
      %p161 = scmp.ne.s32.totalorder %s156, %s158
      %p162 = scmp.eq.s32.totalorder %s17, 0
      %p163 = por %p161, %p162
      %p164 = scmp.ne.s32.totalorder %s156, %s158
      %p165 = scmp.eq.s32.totalorder %s22, 1
      %p166 = por %p164, %p165
      %p167 = scmp.ne.s32.totalorder %s158, %s159
      %p168 = scmp.eq.s32.totalorder %s22, 0
      %p169 = por %p167, %p168
      %p170 = scmp.ne.s32.totalorder %s158, %s159
      %p171 = scmp.eq.s32.totalorder %s23, 1
      %p172 = por %p170, %p171
      %p174 = scmp.ne.s32.totalorder %s159, %s173
      %p175 = scmp.eq.s32.totalorder %s23, 0
      %p176 = por %p174, %p175
      %s177 = ssub.s32 %s17, %s24
      %p178 = scmp.eq.s32.totalorder %s177, 0
      %s180 = sadd.s32 %s179, 1
      %s181 = scalar_select %p178, %s179, %s180
      %p184 = pneg %p178
      %p185 = scmp.eq.s32.totalorder %s17, 1
      %p186 = por %p184, %p185
      %p187 = scmp.ne.s32.totalorder %s179, %s182
      %p188 = scmp.eq.s32.totalorder %s17, 0
      %p189 = por %p187, %p188
      %p190 = scmp.ne.s32.totalorder %s179, %s182
      %p191 = scmp.eq.s32.totalorder %s22, 1
      %p192 = por %p190, %p191
      %p193 = scmp.ne.s32.totalorder %s182, %s183
      %p194 = scmp.eq.s32.totalorder %s22, 0
      %p195 = por %p193, %p194
      %p196 = scmp.ne.s32.totalorder %s182, %s183
      %p197 = scmp.eq.s32.totalorder %s23, 1
      %p198 = por %p196, %p197
      %p200 = scmp.ne.s32.totalorder %s183, %s199
      %p201 = scmp.eq.s32.totalorder %s23, 0
      %p202 = por %p200, %p201
      %p203 = scmp.le.s32.totalorder 1, %s17
      %p204 = scmp.lt.s32.totalorder %s17, 3
      %p205 = pnand %p203, %p204
      %p206 = pneg %p205
      // Predicated region
      $region9: #{tpu_custom_call.1} parent=5 // pred_check
        _
      $region10: #{tpu_custom_call.1} parent=5 // pred_check_branch
        %208 = sbr.rel (%p205) target = $region12
      $region11: #{tpu_custom_call.1} parent=5 // pred_region
        %s209 = ssub.s32 %s17, 1
        // Predicated region
        $region13: #{tpu_custom_call.1} parent=11 // pred_check
          %p210 = pneg %p64
        $region14: #{tpu_custom_call.1} parent=11 // pred_check_branch
          %212 = sbr.rel (%p210) target = $region16
        $region15: #{tpu_custom_call.1} parent=11 // pred_region
          %214 = vsyncadd [#allocation5], 0
          %s215 = sshll.u32 %s1, 4
          %s216 = int_to_ptr.hbm [resolvable:$true] %s215
          %s217 = sshll.u32 [#allocation4], 4
          %s218 = int_to_ptr.vmem [resolvable:$true] %s217
          %223 = dma.hbm_to_vmem [thread:$0]  %s216, 7168, %s218, [#allocation5], 64, 64, 4
        $region16: #{tpu_custom_call.1} parent=11 // pred_fallthru
          _
        // Predicated region
        $region17: #{tpu_custom_call.1} parent=11 // pred_check
          %p224 = pneg %p85
        $region18: #{tpu_custom_call.1} parent=11 // pred_check_branch
          %226 = sbr.rel (%p224) target = $region20
        $region19: #{tpu_custom_call.1} parent=11 // pred_region
          _
        $region20: #{tpu_custom_call.1} parent=11 // pred_fallthru
          _
        // Predicated region
        $region21: #{tpu_custom_call.1} parent=11 // pred_check
          %p227 = pneg %p106
        $region22: #{tpu_custom_call.1} parent=11 // pred_check_branch
          %229 = sbr.rel (%p227) target = $region24
        $region23: #{tpu_custom_call.1} parent=11 // pred_region
          _
        $region24: #{tpu_custom_call.1} parent=11 // pred_fallthru
          _
        // Predicated region
        $region25: #{tpu_custom_call.1} parent=11 // pred_check
          %p230 = pneg %p127
        $region26: #{tpu_custom_call.1} parent=11 // pred_check_branch
          %232 = sbr.rel (%p230) target = $region28
        $region27: #{tpu_custom_call.1} parent=11 // pred_region
          _
        $region28: #{tpu_custom_call.1} parent=11 // pred_fallthru
          _
        // Predicated region
        $region29: #{tpu_custom_call.1} parent=11 // pred_check
          %p233 = pneg %p148
        $region30: #{tpu_custom_call.1} parent=11 // pred_check_branch
          %235 = sbr.rel (%p233) target = $region32
        $region31: #{tpu_custom_call.1} parent=11 // pred_region
          _
        $region32: #{tpu_custom_call.1} parent=11 // pred_fallthru
          _
        // Predicated region
        $region33: #{tpu_custom_call.1} parent=11 // pred_check
          %p236 = pneg %p169
        $region34: #{tpu_custom_call.1} parent=11 // pred_check_branch
          %238 = sbr.rel (%p236) target = $region36
        $region35: #{tpu_custom_call.1} parent=11 // pred_region
          _
        $region36: #{tpu_custom_call.1} parent=11 // pred_fallthru
          _
      $region12: #{tpu_custom_call.1} parent=5 // pred_fallthru
        _
      %p239 = scmp.lt.s32.totalorder %s17, 2
      // Predicated region
      $region37: #{tpu_custom_call.1} parent=5 // pred_check
        %p240 = pneg %p239
      $region38: #{tpu_custom_call.1} parent=5 // pred_check_branch
        %242 = sbr.rel (%p240) target = $region40
      $region39: #{tpu_custom_call.1} parent=5 // pred_region
        // Predicated region
        $region41: #{tpu_custom_call.1} parent=39 // pred_check
          %p243 = pneg %p37
        $region42: #{tpu_custom_call.1} parent=39 // pred_check_branch
          %245 = sbr.rel (%p243) target = $region44
        $region43: #{tpu_custom_call.1} parent=39 // pred_region
          %s246 = sand.u32 %s27, 1
          %s247 = scalar_lea.sflag [#allocation3], %s246
          %s248 = sand.u32 %s27, 1
          %s249 = smul.addr %s248, 448
          %s250 = scalar_lea.vmem [#allocation2], %s249
          %s251 = smul.u32 16, %s17
          %253 = vsyncadd %s247, 0
          %s254 = smul.addr %s251, 7
          %s255 = smul.addr %s254, 4
          %s256 = scalar_lea.hbm %s0, %s255
          %s257 = sshll.u32 %s256, 4
          %s258 = int_to_ptr.hbm [resolvable:$true] %s257
          %s259 = sshll.u32 %s250, 4
          %s260 = int_to_ptr.vmem [resolvable:$true] %s259
          %265 = dma.hbm_to_vmem [thread:$0]  %s258, 7168, %s260, %s247, 448, 448, 28
        $region44: #{tpu_custom_call.1} parent=39 // pred_fallthru
          _
      $region40: #{tpu_custom_call.1} parent=5 // pred_fallthru
        _
      %p266 = scmp.le.s32.totalorder 1, %s17
      %p267 = scmp.lt.s32.totalorder %s17, 3
      %p268 = pnand %p266, %p267
      %p269 = pneg %p268
      // Predicated region
      $region45: #{tpu_custom_call.1} parent=5 // pred_check
        _
      $region46: #{tpu_custom_call.1} parent=5 // pred_check_branch
        %271 = sbr.rel (%p268) target = $region48
      $region47: #{tpu_custom_call.1} parent=5 // pred_region
        %s272 = ssub.s32 %s17, 1
        %s273 = sand.u32 %s30, 1
        %s274 = scalar_lea.sflag [#allocation3], %s273
        %s275 = sand.u32 %s30, 1
        %s276 = smul.addr %s275, 448
        %s277 = scalar_lea.vmem [#allocation2], %s276
        // Predicated region
        $region49: #{tpu_custom_call.1} parent=47 // pred_check
          %p278 = pneg %p43
        $region50: #{tpu_custom_call.1} parent=47 // pred_check_branch
          %280 = sbr.rel (%p278) target = $region52
        $region51: #{tpu_custom_call.1} parent=47 // pred_region
          %282 = dma.done %s274, 7168
        $region52: #{tpu_custom_call.1} parent=47 // pred_fallthru
          _
        // Predicated region
        $region53: #{tpu_custom_call.1} parent=47 // pred_check
          %p283 = pneg %p64
        $region54: #{tpu_custom_call.1} parent=47 // pred_check_branch
          %285 = sbr.rel (%p283) target = $region56
        $region55: #{tpu_custom_call.1} parent=47 // pred_region
          %287 = dma.done [#allocation5], 7168
        $region56: #{tpu_custom_call.1} parent=47 // pred_fallthru
          _
        %s288 = sand.u32 %s30, 1
        %s289 = scalar_lea.sflag [#allocation3], %s288
        %s290 = sand.u32 %s30, 1
        %s291 = smul.addr %s290, 448
        %s292 = scalar_lea.vmem [#allocation2], %s291
        %p293 = pneg %p43
        %p294 = pneg %p40
        %p295 = pneg %p64
        %p296 = pneg %p61
        %p297 = pneg %p85
        %p298 = pneg %p82
        %p299 = pneg %p106
        %p300 = pneg %p103
        %p301 = pneg %p127
        %p302 = pneg %p124
        %p303 = pneg %p148
        %p304 = pneg %p145
        %p305 = pneg %p169
        %p306 = pneg %p166
        %p307 = pneg %p195
        %p308 = pneg %p192
        %s309 = smul.u32 16, %s22
        %p310 = scmp.lt.s32.totalorder %s309, 31
        %s311 = scalar_select %p310, %s309, 31
        %s312 = smul.addr %s311, 8
        %s313 = scalar_lea.vmem %s7, %s312
        %s314 = smul.u32 16, %s22
        %s315 = smul.u32 16, %s22
        %p316 = scmp.lt.s32.totalorder %s315, 31
        %s317 = scalar_select %p316, %s315, 31
        %s318 = smul.addr %s317, 8
        %s319 = scalar_lea.vmem %s7, %s318
        %s320 = smul.u32 16, %s22
        %v322 = vld [vmem:[%s277] sm:$0xff]
        %v323 = vld [vmem:[%s277 + $0x8] sm:$0xff]
        %v324 = vld [vmem:[%s277 + $0x10] sm:$0xff]
        %v325 = vld [vmem:[%s277 + $0x18] sm:$0xf]
        %v326 = vld [vmem:[%s277 + $0x1c] sm:$0xff]
        %v327 = vld [vmem:[%s277 + $0x24] sm:$0xff]
        %v328 = vld [vmem:[%s277 + $0x2c] sm:$0xff]
        %v329 = vld [vmem:[%s277 + $0x34] sm:$0xf]
        %v330 = vld [vmem:[%s277 + $0x38] sm:$0xff]
        %v331 = vld [vmem:[%s277 + $0x40] sm:$0xff]
        %v332 = vld [vmem:[%s277 + $0x48] sm:$0xff]
        %v333 = vld [vmem:[%s277 + $0x50] sm:$0xf]
        %v334 = vld [vmem:[%s277 + $0x54] sm:$0xff]
        %v335 = vld [vmem:[%s277 + $0x5c] sm:$0xff]
        %v336 = vld [vmem:[%s277 + $0x64] sm:$0xff]
        %v337 = vld [vmem:[%s277 + $0x6c] sm:$0xf]
        %v338 = vld [vmem:[%s277 + $0x70] sm:$0xff]
        %v339 = vld [vmem:[%s277 + $0x78] sm:$0xff]
        %v340 = vld [vmem:[%s277 + $0x80] sm:$0xff]
        %v341 = vld [vmem:[%s277 + $0x88] sm:$0xf]
        %v342 = vld [vmem:[%s277 + $0x8c] sm:$0xff]
        %v343 = vld [vmem:[%s277 + $0x94] sm:$0xff]
        %v344 = vld [vmem:[%s277 + $0x9c] sm:$0xff]
        %v345 = vld [vmem:[%s277 + $0xa4] sm:$0xf]
        %v346 = vld [vmem:[%s277 + $0xa8] sm:$0xff]
        %v347 = vld [vmem:[%s277 + $0xb0] sm:$0xff]
        %v348 = vld [vmem:[%s277 + $0xb8] sm:$0xff]
        %v349 = vld [vmem:[%s277 + $0xc0] sm:$0xf]
        %v350 = vld [vmem:[%s277 + $0xc4] sm:$0xff]
        %v351 = vld [vmem:[%s277 + $0xcc] sm:$0xff]
        %v352 = vld [vmem:[%s277 + $0xd4] sm:$0xff]
        %v353 = vld [vmem:[%s277 + $0xdc] sm:$0xf]
        %v354 = vld [vmem:[%s277 + $0xe0] sm:$0xff]
        %v355 = vld [vmem:[%s277 + $0xe8] sm:$0xff]
        %v356 = vld [vmem:[%s277 + $0xf0] sm:$0xff]
        %v357 = vld [vmem:[%s277 + $0xf8] sm:$0xf]
        %v358 = vld [vmem:[%s277 + $0xfc] sm:$0xff]
        %v359 = vld [vmem:[%s277 + $0x104] sm:$0xff]
        %v360 = vld [vmem:[%s277 + $0x10c] sm:$0xff]
        %v361 = vld [vmem:[%s277 + $0x114] sm:$0xf]
        %v362 = vld [vmem:[%s277 + $0x118] sm:$0xff]
        %v363 = vld [vmem:[%s277 + $0x120] sm:$0xff]
        %v364 = vld [vmem:[%s277 + $0x128] sm:$0xff]
        %v365 = vld [vmem:[%s277 + $0x130] sm:$0xf]
        %v366 = vld [vmem:[%s277 + $0x134] sm:$0xff]
        %v367 = vld [vmem:[%s277 + $0x13c] sm:$0xff]
        %v368 = vld [vmem:[%s277 + $0x144] sm:$0xff]
        %v369 = vld [vmem:[%s277 + $0x14c] sm:$0xf]
        %v370 = vld [vmem:[%s277 + $0x150] sm:$0xff]
        %v371 = vld [vmem:[%s277 + $0x158] sm:$0xff]
        %v372 = vld [vmem:[%s277 + $0x160] sm:$0xff]
        %v373 = vld [vmem:[%s277 + $0x168] sm:$0xf]
        %v374 = vld [vmem:[%s277 + $0x16c] sm:$0xff]
        %v375 = vld [vmem:[%s277 + $0x174] sm:$0xff]
        %v376 = vld [vmem:[%s277 + $0x17c] sm:$0xff]
        %v377 = vld [vmem:[%s277 + $0x184] sm:$0xf]
        %v378 = vld [vmem:[%s277 + $0x188] sm:$0xff]
        %v379 = vld [vmem:[%s277 + $0x190] sm:$0xff]
        %v380 = vld [vmem:[%s277 + $0x198] sm:$0xff]
        %v381 = vld [vmem:[%s277 + $0x1a0] sm:$0xf]
        %v382 = vld [vmem:[%s277 + $0x1a4] sm:$0xff]
        %v383 = vld [vmem:[%s277 + $0x1ac] sm:$0xff]
        %v384 = vld [vmem:[%s277 + $0x1b4] sm:$0xff]
        %v385 = vld [vmem:[%s277 + $0x1bc] sm:$0xf]
        %v386 = vld [vmem:[#allocation4] sm:$0xf]
        %v387 = vld [vmem:[#allocation4 + $0x4] sm:$0xf]
        %v388 = vld [vmem:[#allocation4 + $0x8] sm:$0xf]
        %v389 = vld [vmem:[#allocation4 + $0xc] sm:$0xf]
        %v390 = vld [vmem:[#allocation4 + $0x10] sm:$0xf]
        %v391 = vld [vmem:[#allocation4 + $0x14] sm:$0xf]
        %v392 = vld [vmem:[#allocation4 + $0x18] sm:$0xf]
        %v393 = vld [vmem:[#allocation4 + $0x1c] sm:$0xf]
        %v394 = vld [vmem:[#allocation4 + $0x20] sm:$0xf]
        %v395 = vld [vmem:[#allocation4 + $0x24] sm:$0xf]
        %v396 = vld [vmem:[#allocation4 + $0x28] sm:$0xf]
        %v397 = vld [vmem:[#allocation4 + $0x2c] sm:$0xf]
        %v398 = vld [vmem:[#allocation4 + $0x30] sm:$0xf]
        %v399 = vld [vmem:[#allocation4 + $0x34] sm:$0xf]
        %v400 = vld [vmem:[#allocation4 + $0x38] sm:$0xf]
        %v401 = vld [vmem:[#allocation4 + $0x3c] sm:$0xf]
        %v402 = vld [vmem:[#allocation4 + $0x40] sm:$0xf]
        %v403 = vld [vmem:[#allocation4 + $0x44] sm:$0xf]
        %v404 = vld [vmem:[#allocation4 + $0x48] sm:$0xf]
        %v405 = vld [vmem:[#allocation4 + $0x4c] sm:$0xf]
        %v406 = vld [vmem:[#allocation4 + $0x50] sm:$0xf]
        %v407 = vld [vmem:[#allocation4 + $0x54] sm:$0xf]
        %v408 = vld [vmem:[#allocation4 + $0x58] sm:$0xf]
        %v409 = vld [vmem:[#allocation4 + $0x5c] sm:$0xf]
        %v410 = vld [vmem:[#allocation4 + $0x60] sm:$0xf]
        %v411 = vld [vmem:[#allocation4 + $0x64] sm:$0xf]
        %v412 = vld [vmem:[#allocation4 + $0x68] sm:$0xf]
        %v413 = vld [vmem:[#allocation4 + $0x6c] sm:$0xf]
        %v414 = vld [vmem:[#allocation4 + $0x70] sm:$0xf]
        %v415 = vld [vmem:[#allocation4 + $0x74] sm:$0xf]
        %v416 = vld [vmem:[#allocation4 + $0x78] sm:$0xf]
        %v417 = vld [vmem:[#allocation4 + $0x7c] sm:$0xf]
        %v418 = vld [vmem:[#allocation4 + $0x80] sm:$0xf]
        %v419 = vld [vmem:[#allocation4 + $0x84] sm:$0xf]
        %v420 = vld [vmem:[#allocation4 + $0x88] sm:$0xf]
        %v421 = vld [vmem:[#allocation4 + $0x8c] sm:$0xf]
        %v422 = vld [vmem:[#allocation4 + $0x90] sm:$0xf]
        %v423 = vld [vmem:[#allocation4 + $0x94] sm:$0xf]
        %v424 = vld [vmem:[#allocation4 + $0x98] sm:$0xf]
        %v425 = vld [vmem:[#allocation4 + $0x9c] sm:$0xf]
        %v426 = vld [vmem:[#allocation4 + $0xa0] sm:$0xf]
        %v427 = vld [vmem:[#allocation4 + $0xa4] sm:$0xf]
        %v428 = vld [vmem:[#allocation4 + $0xa8] sm:$0xf]
        %v429 = vld [vmem:[#allocation4 + $0xac] sm:$0xf]
        %v430 = vld [vmem:[#allocation4 + $0xb0] sm:$0xf]
        %v431 = vld [vmem:[#allocation4 + $0xb4] sm:$0xf]
        %v432 = vld [vmem:[#allocation4 + $0xb8] sm:$0xf]
        %v433 = vld [vmem:[#allocation4 + $0xbc] sm:$0xf]
        %v434 = vld [vmem:[#allocation4 + $0xc0] sm:$0xf]
        %v435 = vld [vmem:[#allocation4 + $0xc4] sm:$0xf]
        %v436 = vld [vmem:[#allocation4 + $0xc8] sm:$0xf]
        %v437 = vld [vmem:[#allocation4 + $0xcc] sm:$0xf]
        %v438 = vld [vmem:[#allocation4 + $0xd0] sm:$0xf]
        %v439 = vld [vmem:[#allocation4 + $0xd4] sm:$0xf]
        %v440 = vld [vmem:[#allocation4 + $0xd8] sm:$0xf]
        %v441 = vld [vmem:[#allocation4 + $0xdc] sm:$0xf]
        %v442 = vld [vmem:[#allocation4 + $0xe0] sm:$0xf]
        %v443 = vld [vmem:[#allocation4 + $0xe4] sm:$0xf]
        %v444 = vld [vmem:[#allocation4 + $0xe8] sm:$0xf]
        %v445 = vld [vmem:[#allocation4 + $0xec] sm:$0xf]
        %v446 = vld [vmem:[#allocation4 + $0xf0] sm:$0xf]
        %v447 = vld [vmem:[#allocation4 + $0xf4] sm:$0xf]
        %v448 = vld [vmem:[#allocation4 + $0xf8] sm:$0xf]
        %v449 = vld [vmem:[#allocation4 + $0xfc] sm:$0xf]
        %v450 = vld [vmem:[#allocation4 + $0x100] sm:$0xf]
        %v451 = vld [vmem:[#allocation4 + $0x104] sm:$0xf]
        %v452 = vld [vmem:[#allocation4 + $0x108] sm:$0xf]
        %v453 = vld [vmem:[#allocation4 + $0x10c] sm:$0xf]
        %v454 = vld [vmem:[#allocation4 + $0x110] sm:$0xf]
        %v455 = vld [vmem:[#allocation4 + $0x114] sm:$0xf]
        %v456 = vld [vmem:[#allocation4 + $0x118] sm:$0xf]
        %v457 = vld [vmem:[#allocation4 + $0x11c] sm:$0xf]
        %v458 = vld [vmem:[#allocation4 + $0x120] sm:$0xf]
        %v459 = vld [vmem:[#allocation4 + $0x124] sm:$0xf]
        %v460 = vld [vmem:[#allocation4 + $0x128] sm:$0xf]
        %v461 = vld [vmem:[#allocation4 + $0x12c] sm:$0xf]
        %v462 = vld [vmem:[#allocation4 + $0x130] sm:$0xf]
        %v463 = vld [vmem:[#allocation4 + $0x134] sm:$0xf]
        %v464 = vld [vmem:[#allocation4 + $0x138] sm:$0xf]
        %v465 = vld [vmem:[#allocation4 + $0x13c] sm:$0xf]
        %v466 = vld [vmem:[#allocation4 + $0x140] sm:$0xf]
        %v467 = vld [vmem:[#allocation4 + $0x144] sm:$0xf]
        %v468 = vld [vmem:[#allocation4 + $0x148] sm:$0xf]
        %v469 = vld [vmem:[#allocation4 + $0x14c] sm:$0xf]
        %v470 = vld [vmem:[#allocation4 + $0x150] sm:$0xf]
        %v471 = vld [vmem:[#allocation4 + $0x154] sm:$0xf]
        %v472 = vld [vmem:[#allocation4 + $0x158] sm:$0xf]
        %v473 = vld [vmem:[#allocation4 + $0x15c] sm:$0xf]
        %v474 = vld [vmem:[#allocation4 + $0x160] sm:$0xf]
        %v475 = vld [vmem:[#allocation4 + $0x164] sm:$0xf]
        %v476 = vld [vmem:[#allocation4 + $0x168] sm:$0xf]
        %v477 = vld [vmem:[#allocation4 + $0x16c] sm:$0xf]
        %v478 = vld [vmem:[#allocation4 + $0x170] sm:$0xf]
        %v479 = vld [vmem:[#allocation4 + $0x174] sm:$0xf]
        %v480 = vld [vmem:[#allocation4 + $0x178] sm:$0xf]
        %v481 = vld [vmem:[#allocation4 + $0x17c] sm:$0xf]
        %v482 = vld [vmem:[#allocation4 + $0x180] sm:$0xf]
        %v483 = vld [vmem:[#allocation4 + $0x184] sm:$0xf]
        %v484 = vld [vmem:[#allocation4 + $0x188] sm:$0xf]
        %v485 = vld [vmem:[#allocation4 + $0x18c] sm:$0xf]
        %v486 = vld [vmem:[#allocation4 + $0x190] sm:$0xf]
        %v487 = vld [vmem:[#allocation4 + $0x194] sm:$0xf]
        %v488 = vld [vmem:[#allocation4 + $0x198] sm:$0xf]
        %v489 = vld [vmem:[#allocation4 + $0x19c] sm:$0xf]
        %v490 = vld [vmem:[#allocation4 + $0x1a0] sm:$0xf]
        %v491 = vld [vmem:[#allocation4 + $0x1a4] sm:$0xf]
        %v492 = vld [vmem:[#allocation4 + $0x1a8] sm:$0xf]
        %v493 = vld [vmem:[#allocation4 + $0x1ac] sm:$0xf]
        %v494 = vld [vmem:[#allocation4 + $0x1b0] sm:$0xf]
        %v495 = vld [vmem:[#allocation4 + $0x1b4] sm:$0xf]
        %v496 = vld [vmem:[#allocation4 + $0x1b8] sm:$0xf]
        %v497 = vld [vmem:[#allocation4 + $0x1bc] sm:$0xf]
        %v498 = vld [vmem:[%s2] sm:$0x1]
        %v500 = vperm.slane %v498, 0
        %v566 = vunpack.c.l.b16 %v322
        %v567 = vunpack.c.h.b16 %v322
        %v568 = vunpack.c.l.b16 %v323
        %v569 = vunpack.c.h.b16 %v323
        %v570 = vunpack.c.l.b16 %v324
        %v571 = vunpack.c.h.b16 %v324
        %v572 = vunpack.c.l.b16 %v325
        %v573 = vunpack.c.l.b16 %v326
        %v574 = vunpack.c.h.b16 %v326
        %v575 = vunpack.c.l.b16 %v327
        %v576 = vunpack.c.h.b16 %v327
        %v577 = vunpack.c.l.b16 %v328
        %v578 = vunpack.c.h.b16 %v328
        %v579 = vunpack.c.l.b16 %v329
        %v580 = vunpack.c.l.b16 %v330
        %v581 = vunpack.c.h.b16 %v330
        %v582 = vunpack.c.l.b16 %v331
        %v583 = vunpack.c.h.b16 %v331
        %v584 = vunpack.c.l.b16 %v332
        %v585 = vunpack.c.h.b16 %v332
        %v586 = vunpack.c.l.b16 %v333
        %v587 = vunpack.c.l.b16 %v334
        %v588 = vunpack.c.h.b16 %v334
        %v589 = vunpack.c.l.b16 %v335
        %v590 = vunpack.c.h.b16 %v335
        %v591 = vunpack.c.l.b16 %v336
        %v592 = vunpack.c.h.b16 %v336
        %v593 = vunpack.c.l.b16 %v337
        %v594 = vunpack.c.l.b16 %v338
        %v595 = vunpack.c.h.b16 %v338
        %v596 = vunpack.c.l.b16 %v339
        %v597 = vunpack.c.h.b16 %v339
        %v598 = vunpack.c.l.b16 %v340
        %v599 = vunpack.c.h.b16 %v340
        %v600 = vunpack.c.l.b16 %v341
        %v601 = vunpack.c.l.b16 %v342
        %v602 = vunpack.c.h.b16 %v342
        %v603 = vunpack.c.l.b16 %v343
        %v604 = vunpack.c.h.b16 %v343
        %v605 = vunpack.c.l.b16 %v344
        %v606 = vunpack.c.h.b16 %v344
        %v607 = vunpack.c.l.b16 %v345
        %v608 = vunpack.c.l.b16 %v346
        %v609 = vunpack.c.h.b16 %v346
        %v610 = vunpack.c.l.b16 %v347
        %v611 = vunpack.c.h.b16 %v347
        %v612 = vunpack.c.l.b16 %v348
        %v613 = vunpack.c.h.b16 %v348
        %v614 = vunpack.c.l.b16 %v349
        %v615 = vunpack.c.l.b16 %v350
        %v616 = vunpack.c.h.b16 %v350
        %v617 = vunpack.c.l.b16 %v351
        %v618 = vunpack.c.h.b16 %v351
        %v619 = vunpack.c.l.b16 %v352
        %v620 = vunpack.c.h.b16 %v352
        %v621 = vunpack.c.l.b16 %v353
        %v622 = vunpack.c.l.b16 %v354
        %v623 = vunpack.c.h.b16 %v354
        %v624 = vunpack.c.l.b16 %v355
        %v625 = vunpack.c.h.b16 %v355
        %v626 = vunpack.c.l.b16 %v356
        %v627 = vunpack.c.h.b16 %v356
        %v628 = vunpack.c.l.b16 %v357
        %v629 = vunpack.c.l.b16 %v358
        %v630 = vunpack.c.h.b16 %v358
        %v631 = vunpack.c.l.b16 %v359
        %v632 = vunpack.c.h.b16 %v359
        %v633 = vunpack.c.l.b16 %v360
        %v634 = vunpack.c.h.b16 %v360
        %v635 = vunpack.c.l.b16 %v361
        %v636 = vunpack.c.l.b16 %v362
        %v637 = vunpack.c.h.b16 %v362
        %v638 = vunpack.c.l.b16 %v363
        %v639 = vunpack.c.h.b16 %v363
        %v640 = vunpack.c.l.b16 %v364
        %v641 = vunpack.c.h.b16 %v364
        %v642 = vunpack.c.l.b16 %v365
        %v643 = vunpack.c.l.b16 %v366
        %v644 = vunpack.c.h.b16 %v366
        %v645 = vunpack.c.l.b16 %v367
        %v646 = vunpack.c.h.b16 %v367
        %v647 = vunpack.c.l.b16 %v368
        %v648 = vunpack.c.h.b16 %v368
        %v649 = vunpack.c.l.b16 %v369
        %v650 = vunpack.c.l.b16 %v370
        %v651 = vunpack.c.h.b16 %v370
        %v652 = vunpack.c.l.b16 %v371
        %v653 = vunpack.c.h.b16 %v371
        %v654 = vunpack.c.l.b16 %v372
        %v655 = vunpack.c.h.b16 %v372
        %v656 = vunpack.c.l.b16 %v373
        %v657 = vunpack.c.l.b16 %v374
        %v658 = vunpack.c.h.b16 %v374
        %v659 = vunpack.c.l.b16 %v375
        %v660 = vunpack.c.h.b16 %v375
        %v661 = vunpack.c.l.b16 %v376
        %v662 = vunpack.c.h.b16 %v376
        %v663 = vunpack.c.l.b16 %v377
        %v664 = vunpack.c.l.b16 %v378
        %v665 = vunpack.c.h.b16 %v378
        %v666 = vunpack.c.l.b16 %v379
        %v667 = vunpack.c.h.b16 %v379
        %v668 = vunpack.c.l.b16 %v380
        %v669 = vunpack.c.h.b16 %v380
        %v670 = vunpack.c.l.b16 %v381
        %v671 = vunpack.c.l.b16 %v382
        %v672 = vunpack.c.h.b16 %v382
        %v673 = vunpack.c.l.b16 %v383
        %v674 = vunpack.c.h.b16 %v383
        %v675 = vunpack.c.l.b16 %v384
        %v676 = vunpack.c.h.b16 %v384
        %v677 = vunpack.c.l.b16 %v385
        %v678 = vpack.c.b16 %v573, %v566
        %v679 = vpack.c.b16 %v574, %v567
        %v680 = vpack.c.b16 %v575, %v568
        %v681 = vpack.c.b16 %v576, %v569
        %v682 = vpack.c.b16 %v577, %v570
        %v683 = vpack.c.b16 %v578, %v571
        %v684 = vpack.c.b16 %v579, %v572
        %v685 = vpack.c.b16 %v587, %v580
        %v686 = vpack.c.b16 %v588, %v581
        %v687 = vpack.c.b16 %v589, %v582
        %v688 = vpack.c.b16 %v590, %v583
        %v689 = vpack.c.b16 %v591, %v584
        %v690 = vpack.c.b16 %v592, %v585
        %v691 = vpack.c.b16 %v593, %v586
        %v692 = vpack.c.b16 %v601, %v594
        %v693 = vpack.c.b16 %v602, %v595
        %v694 = vpack.c.b16 %v603, %v596
        %v695 = vpack.c.b16 %v604, %v597
        %v696 = vpack.c.b16 %v605, %v598
        %v697 = vpack.c.b16 %v606, %v599
        %v698 = vpack.c.b16 %v607, %v600
        %v699 = vpack.c.b16 %v615, %v608
        %v700 = vpack.c.b16 %v616, %v609
        %v701 = vpack.c.b16 %v617, %v610
        %v702 = vpack.c.b16 %v618, %v611
        %v703 = vpack.c.b16 %v619, %v612
        %v704 = vpack.c.b16 %v620, %v613
        %v705 = vpack.c.b16 %v621, %v614
        %v706 = vpack.c.b16 %v629, %v622
        %v707 = vpack.c.b16 %v630, %v623
        %v708 = vpack.c.b16 %v631, %v624
        %v709 = vpack.c.b16 %v632, %v625
        %v710 = vpack.c.b16 %v633, %v626
        %v711 = vpack.c.b16 %v634, %v627
        %v712 = vpack.c.b16 %v635, %v628
        %v713 = vpack.c.b16 %v643, %v636
        %v714 = vpack.c.b16 %v644, %v637
        %v715 = vpack.c.b16 %v645, %v638
        %v716 = vpack.c.b16 %v646, %v639
        %v717 = vpack.c.b16 %v647, %v640
        %v718 = vpack.c.b16 %v648, %v641
        %v719 = vpack.c.b16 %v649, %v642
        %v720 = vpack.c.b16 %v657, %v650
        %v721 = vpack.c.b16 %v658, %v651
        %v722 = vpack.c.b16 %v659, %v652
        %v723 = vpack.c.b16 %v660, %v653
        %v724 = vpack.c.b16 %v661, %v654
        %v725 = vpack.c.b16 %v662, %v655
        %v726 = vpack.c.b16 %v663, %v656
        %v727 = vpack.c.b16 %v671, %v664
        %v728 = vpack.c.b16 %v672, %v665
        %v729 = vpack.c.b16 %v673, %v666
        %v730 = vpack.c.b16 %v674, %v667
        %v731 = vpack.c.b16 %v675, %v668
        %v732 = vpack.c.b16 %v676, %v669
        %v733 = vpack.c.b16 %v677, %v670
        %v902 = vunpack.c.l.b16 %v386
        %v903 = vunpack.c.l.b16 %v387
        %v904 = vunpack.c.l.b16 %v388
        %v905 = vunpack.c.l.b16 %v389
        %v906 = vunpack.c.l.b16 %v390
        %v907 = vunpack.c.l.b16 %v391
        %v908 = vunpack.c.l.b16 %v392
        %v909 = vunpack.c.l.b16 %v393
        %v910 = vunpack.c.l.b16 %v394
        %v911 = vunpack.c.l.b16 %v395
        %v912 = vunpack.c.l.b16 %v396
        %v913 = vunpack.c.l.b16 %v397
        %v914 = vunpack.c.l.b16 %v398
        %v915 = vunpack.c.l.b16 %v399
        %v916 = vunpack.c.l.b16 %v400
        %v917 = vunpack.c.l.b16 %v401
        %v918 = vunpack.c.l.b16 %v402
        %v919 = vunpack.c.l.b16 %v403
        %v920 = vunpack.c.l.b16 %v404
        %v921 = vunpack.c.l.b16 %v405
        %v922 = vunpack.c.l.b16 %v406
        %v923 = vunpack.c.l.b16 %v407
        %v924 = vunpack.c.l.b16 %v408
        %v925 = vunpack.c.l.b16 %v409
        %v926 = vunpack.c.l.b16 %v410
        %v927 = vunpack.c.l.b16 %v411
        %v928 = vunpack.c.l.b16 %v412
        %v929 = vunpack.c.l.b16 %v413
        %v930 = vunpack.c.l.b16 %v414
        %v931 = vunpack.c.l.b16 %v415
        %v932 = vunpack.c.l.b16 %v416
        %v933 = vunpack.c.l.b16 %v417
        %v934 = vunpack.c.l.b16 %v418
        %v935 = vunpack.c.l.b16 %v419
        %v936 = vunpack.c.l.b16 %v420
        %v937 = vunpack.c.l.b16 %v421
        %v938 = vunpack.c.l.b16 %v422
        %v939 = vunpack.c.l.b16 %v423
        %v940 = vunpack.c.l.b16 %v424
        %v941 = vunpack.c.l.b16 %v425
        %v942 = vunpack.c.l.b16 %v426
        %v943 = vunpack.c.l.b16 %v427
        %v944 = vunpack.c.l.b16 %v428
        %v945 = vunpack.c.l.b16 %v429
        %v946 = vunpack.c.l.b16 %v430
        %v947 = vunpack.c.l.b16 %v431
        %v948 = vunpack.c.l.b16 %v432
        %v949 = vunpack.c.l.b16 %v433
        %v950 = vunpack.c.l.b16 %v434
        %v951 = vunpack.c.l.b16 %v435
        %v952 = vunpack.c.l.b16 %v436
        %v953 = vunpack.c.l.b16 %v437
        %v954 = vunpack.c.l.b16 %v438
        %v955 = vunpack.c.l.b16 %v439
        %v956 = vunpack.c.l.b16 %v440
        %v957 = vunpack.c.l.b16 %v441
        %v958 = vunpack.c.l.b16 %v442
        %v959 = vunpack.c.l.b16 %v443
        %v960 = vunpack.c.l.b16 %v444
        %v961 = vunpack.c.l.b16 %v445
        %v962 = vunpack.c.l.b16 %v446
        %v963 = vunpack.c.l.b16 %v447
        %v964 = vunpack.c.l.b16 %v448
        %v965 = vunpack.c.l.b16 %v449
        %v966 = vunpack.c.l.b16 %v450
        %v967 = vunpack.c.l.b16 %v451
        %v968 = vunpack.c.l.b16 %v452
        %v969 = vunpack.c.l.b16 %v453
        %v970 = vunpack.c.l.b16 %v454
        %v971 = vunpack.c.l.b16 %v455
        %v972 = vunpack.c.l.b16 %v456
        %v973 = vunpack.c.l.b16 %v457
        %v974 = vunpack.c.l.b16 %v458
        %v975 = vunpack.c.l.b16 %v459
        %v976 = vunpack.c.l.b16 %v460
        %v977 = vunpack.c.l.b16 %v461
        %v978 = vunpack.c.l.b16 %v462
        %v979 = vunpack.c.l.b16 %v463
        %v980 = vunpack.c.l.b16 %v464
        %v981 = vunpack.c.l.b16 %v465
        %v982 = vunpack.c.l.b16 %v466
        %v983 = vunpack.c.l.b16 %v467
        %v984 = vunpack.c.l.b16 %v468
        %v985 = vunpack.c.l.b16 %v469
        %v986 = vunpack.c.l.b16 %v470
        %v987 = vunpack.c.l.b16 %v471
        %v988 = vunpack.c.l.b16 %v472
        %v989 = vunpack.c.l.b16 %v473
        %v990 = vunpack.c.l.b16 %v474
        %v991 = vunpack.c.l.b16 %v475
        %v992 = vunpack.c.l.b16 %v476
        %v993 = vunpack.c.l.b16 %v477
        %v994 = vunpack.c.l.b16 %v478
        %v995 = vunpack.c.l.b16 %v479
        %v996 = vunpack.c.l.b16 %v480
        %v997 = vunpack.c.l.b16 %v481
        %v998 = vunpack.c.l.b16 %v482
        %v999 = vunpack.c.l.b16 %v483
        %v1000 = vunpack.c.l.b16 %v484
        %v1001 = vunpack.c.l.b16 %v485
        %v1002 = vunpack.c.l.b16 %v486
        %v1003 = vunpack.c.l.b16 %v487
        %v1004 = vunpack.c.l.b16 %v488
        %v1005 = vunpack.c.l.b16 %v489
        %v1006 = vunpack.c.l.b16 %v490
        %v1007 = vunpack.c.l.b16 %v491
        %v1008 = vunpack.c.l.b16 %v492
        %v1009 = vunpack.c.l.b16 %v493
        %v1010 = vunpack.c.l.b16 %v494
        %v1011 = vunpack.c.l.b16 %v495
        %v1012 = vunpack.c.l.b16 %v496
        %v1013 = vunpack.c.l.b16 %v497
        %v1014 = vpack.c.b16 %v903, %v902
        %v1015 = vpack.c.b16 %v905, %v904
        %v1016 = vpack.c.b16 %v907, %v906
        %v1017 = vpack.c.b16 %v909, %v908
        %v1018 = vpack.c.b16 %v911, %v910
        %v1019 = vpack.c.b16 %v913, %v912
        %v1020 = vpack.c.b16 %v915, %v914
        %v1021 = vpack.c.b16 %v917, %v916
        %v1022 = vpack.c.b16 %v919, %v918
        %v1023 = vpack.c.b16 %v921, %v920
        %v1024 = vpack.c.b16 %v923, %v922
        %v1025 = vpack.c.b16 %v925, %v924
        %v1026 = vpack.c.b16 %v927, %v926
        %v1027 = vpack.c.b16 %v929, %v928
        %v1028 = vpack.c.b16 %v931, %v930
        %v1029 = vpack.c.b16 %v933, %v932
        %v1030 = vpack.c.b16 %v935, %v934
        %v1031 = vpack.c.b16 %v937, %v936
        %v1032 = vpack.c.b16 %v939, %v938
        %v1033 = vpack.c.b16 %v941, %v940
        %v1034 = vpack.c.b16 %v943, %v942
        %v1035 = vpack.c.b16 %v945, %v944
        %v1036 = vpack.c.b16 %v947, %v946
        %v1037 = vpack.c.b16 %v949, %v948
        %v1038 = vpack.c.b16 %v951, %v950
        %v1039 = vpack.c.b16 %v953, %v952
        %v1040 = vpack.c.b16 %v955, %v954
        %v1041 = vpack.c.b16 %v957, %v956
        %v1042 = vpack.c.b16 %v959, %v958
        %v1043 = vpack.c.b16 %v961, %v960
        %v1044 = vpack.c.b16 %v963, %v962
        %v1045 = vpack.c.b16 %v965, %v964
        %v1046 = vpack.c.b16 %v967, %v966
        %v1047 = vpack.c.b16 %v969, %v968
        %v1048 = vpack.c.b16 %v971, %v970
        %v1049 = vpack.c.b16 %v973, %v972
        %v1050 = vpack.c.b16 %v975, %v974
        %v1051 = vpack.c.b16 %v977, %v976
        %v1052 = vpack.c.b16 %v979, %v978
        %v1053 = vpack.c.b16 %v981, %v980
        %v1054 = vpack.c.b16 %v983, %v982
        %v1055 = vpack.c.b16 %v985, %v984
        %v1056 = vpack.c.b16 %v987, %v986
        %v1057 = vpack.c.b16 %v989, %v988
        %v1058 = vpack.c.b16 %v991, %v990
        %v1059 = vpack.c.b16 %v993, %v992
        %v1060 = vpack.c.b16 %v995, %v994
        %v1061 = vpack.c.b16 %v997, %v996
        %v1062 = vpack.c.b16 %v999, %v998
        %v1063 = vpack.c.b16 %v1001, %v1000
        %v1064 = vpack.c.b16 %v1003, %v1002
        %v1065 = vpack.c.b16 %v1005, %v1004
        %v1066 = vpack.c.b16 %v1007, %v1006
        %v1067 = vpack.c.b16 %v1009, %v1008
        %v1068 = vpack.c.b16 %v1011, %v1010
        %v1069 = vpack.c.b16 %v1013, %v1012
        %1126 = vmatpush.bf16.msra.mxu0 %v1021
        %1127 = vmatpush.bf16.msra.mxu0 %v1020
        %1128 = vmatpush.bf16.msra.mxu0 %v1019
        %1129 = vmatpush.bf16.msra.mxu0 %v1018
        %1130 = vmatpush.bf16.msra.mxu0 %v1017
        %1131 = vmatpush.bf16.msra.mxu0 %v1016
        %1132 = vmatpush.bf16.msra.mxu0 %v1015
        %1133 = vmatpush.bf16.msra.mxu0 %v1014
        %1134 = vmatmul.bf16.gmra.mxu0 %v678
        %v1135 = vpop.f32.mrf.mxu0
        %v1136 = vadd.f32 %v500, %v1135
        %v1137 = vpop.f32.mrf.mxu0
        %v1138 = vadd.f32 %v500, %v1137
        %1139 = vmatmul.bf16.gmra.mxu0 %v685
        %v1140 = vpop.f32.mrf.mxu0
        %v1141 = vadd.f32 %v500, %v1140
        %v1142 = vpop.f32.mrf.mxu0
        %v1143 = vadd.f32 %v500, %v1142
        %1144 = vmatmul.bf16.gmra.mxu0 %v692
        %v1145 = vpop.f32.mrf.mxu0
        %v1146 = vadd.f32 %v500, %v1145
        %v1147 = vpop.f32.mrf.mxu0
        %v1148 = vadd.f32 %v500, %v1147
        %1149 = vmatmul.bf16.gmra.mxu0 %v699
        %v1150 = vpop.f32.mrf.mxu0
        %v1151 = vadd.f32 %v500, %v1150
        %v1152 = vpop.f32.mrf.mxu0
        %v1153 = vadd.f32 %v500, %v1152
        %1154 = vmatmul.bf16.gmra.mxu0 %v706
        %v1155 = vpop.f32.mrf.mxu0
        %v1156 = vadd.f32 %v500, %v1155
        %v1157 = vpop.f32.mrf.mxu0
        %v1158 = vadd.f32 %v500, %v1157
        %1159 = vmatmul.bf16.gmra.mxu0 %v713
        %v1160 = vpop.f32.mrf.mxu0
        %v1161 = vadd.f32 %v500, %v1160
        %v1162 = vpop.f32.mrf.mxu0
        %v1163 = vadd.f32 %v500, %v1162
        %1164 = vmatmul.bf16.gmra.mxu0 %v720
        %v1165 = vpop.f32.mrf.mxu0
        %v1166 = vadd.f32 %v500, %v1165
        %v1167 = vpop.f32.mrf.mxu0
        %v1168 = vadd.f32 %v500, %v1167
        %1169 = vmatmul.bf16.gmra.mxu0 %v727
        %v1170 = vpop.f32.mrf.mxu0
        %v1171 = vadd.f32 %v500, %v1170
        %v1172 = vpop.f32.mrf.mxu0
        %v1173 = vadd.f32 %v500, %v1172
        %1174 = vdwg.mxu0
        %1175 = vmatpush.bf16.msra.mxu0 %v1029
        %1176 = vmatpush.bf16.msra.mxu0 %v1028
        %1177 = vmatpush.bf16.msra.mxu0 %v1027
        %1178 = vmatpush.bf16.msra.mxu0 %v1026
        %1179 = vmatpush.bf16.msra.mxu0 %v1025
        %1180 = vmatpush.bf16.msra.mxu0 %v1024
        %1181 = vmatpush.bf16.msra.mxu0 %v1023
        %1182 = vmatpush.bf16.msra.mxu0 %v1022
        %1183 = vmatmul.bf16.gmra.mxu0 %v679
        %v1184 = vpop.f32.mrf.mxu0
        %v1185 = vadd.f32 %v1136, %v1184
        %v1186 = vpop.f32.mrf.mxu0
        %v1187 = vadd.f32 %v1138, %v1186
        %1188 = vmatmul.bf16.gmra.mxu0 %v686
        %v1189 = vpop.f32.mrf.mxu0
        %v1190 = vadd.f32 %v1141, %v1189
        %v1191 = vpop.f32.mrf.mxu0
        %v1192 = vadd.f32 %v1143, %v1191
        %1193 = vmatmul.bf16.gmra.mxu0 %v693
        %v1194 = vpop.f32.mrf.mxu0
        %v1195 = vadd.f32 %v1146, %v1194
        %v1196 = vpop.f32.mrf.mxu0
        %v1197 = vadd.f32 %v1148, %v1196
        %1198 = vmatmul.bf16.gmra.mxu0 %v700
        %v1199 = vpop.f32.mrf.mxu0
        %v1200 = vadd.f32 %v1151, %v1199
        %v1201 = vpop.f32.mrf.mxu0
        %v1202 = vadd.f32 %v1153, %v1201
        %1203 = vmatmul.bf16.gmra.mxu0 %v707
        %v1204 = vpop.f32.mrf.mxu0
        %v1205 = vadd.f32 %v1156, %v1204
        %v1206 = vpop.f32.mrf.mxu0
        %v1207 = vadd.f32 %v1158, %v1206
        %1208 = vmatmul.bf16.gmra.mxu0 %v714
        %v1209 = vpop.f32.mrf.mxu0
        %v1210 = vadd.f32 %v1161, %v1209
        %v1211 = vpop.f32.mrf.mxu0
        %v1212 = vadd.f32 %v1163, %v1211
        %1213 = vmatmul.bf16.gmra.mxu0 %v721
        %v1214 = vpop.f32.mrf.mxu0
        %v1215 = vadd.f32 %v1166, %v1214
        %v1216 = vpop.f32.mrf.mxu0
        %v1217 = vadd.f32 %v1168, %v1216
        %1218 = vmatmul.bf16.gmra.mxu0 %v728
        %v1219 = vpop.f32.mrf.mxu0
        %v1220 = vadd.f32 %v1171, %v1219
        %v1221 = vpop.f32.mrf.mxu0
        %v1222 = vadd.f32 %v1173, %v1221
        %1223 = vdwg.mxu0
        %1224 = vmatpush.bf16.msra.mxu0 %v1037
        %1225 = vmatpush.bf16.msra.mxu0 %v1036
        %1226 = vmatpush.bf16.msra.mxu0 %v1035
        %1227 = vmatpush.bf16.msra.mxu0 %v1034
        %1228 = vmatpush.bf16.msra.mxu0 %v1033
        %1229 = vmatpush.bf16.msra.mxu0 %v1032
        %1230 = vmatpush.bf16.msra.mxu0 %v1031
        %1231 = vmatpush.bf16.msra.mxu0 %v1030
        %1232 = vmatmul.bf16.gmra.mxu0 %v680
        %v1233 = vpop.f32.mrf.mxu0
        %v1234 = vadd.f32 %v1185, %v1233
        %v1235 = vpop.f32.mrf.mxu0
        %v1236 = vadd.f32 %v1187, %v1235
        %1237 = vmatmul.bf16.gmra.mxu0 %v687
        %v1238 = vpop.f32.mrf.mxu0
        %v1239 = vadd.f32 %v1190, %v1238
        %v1240 = vpop.f32.mrf.mxu0
        %v1241 = vadd.f32 %v1192, %v1240
        %1242 = vmatmul.bf16.gmra.mxu0 %v694
        %v1243 = vpop.f32.mrf.mxu0
        %v1244 = vadd.f32 %v1195, %v1243
        %v1245 = vpop.f32.mrf.mxu0
        %v1246 = vadd.f32 %v1197, %v1245
        %1247 = vmatmul.bf16.gmra.mxu0 %v701
        %v1248 = vpop.f32.mrf.mxu0
        %v1249 = vadd.f32 %v1200, %v1248
        %v1250 = vpop.f32.mrf.mxu0
        %v1251 = vadd.f32 %v1202, %v1250
        %1252 = vmatmul.bf16.gmra.mxu0 %v708
        %v1253 = vpop.f32.mrf.mxu0
        %v1254 = vadd.f32 %v1205, %v1253
        %v1255 = vpop.f32.mrf.mxu0
        %v1256 = vadd.f32 %v1207, %v1255
        %1257 = vmatmul.bf16.gmra.mxu0 %v715
        %v1258 = vpop.f32.mrf.mxu0
        %v1259 = vadd.f32 %v1210, %v1258
        %v1260 = vpop.f32.mrf.mxu0
        %v1261 = vadd.f32 %v1212, %v1260
        %1262 = vmatmul.bf16.gmra.mxu0 %v722
        %v1263 = vpop.f32.mrf.mxu0
        %v1264 = vadd.f32 %v1215, %v1263
        %v1265 = vpop.f32.mrf.mxu0
        %v1266 = vadd.f32 %v1217, %v1265
        %1267 = vmatmul.bf16.gmra.mxu0 %v729
        %v1268 = vpop.f32.mrf.mxu0
        %v1269 = vadd.f32 %v1220, %v1268
        %v1270 = vpop.f32.mrf.mxu0
        %v1271 = vadd.f32 %v1222, %v1270
        %1272 = vdwg.mxu0
        %1273 = vmatpush.bf16.msra.mxu0 %v1045
        %1274 = vmatpush.bf16.msra.mxu0 %v1044
        %1275 = vmatpush.bf16.msra.mxu0 %v1043
        %1276 = vmatpush.bf16.msra.mxu0 %v1042
        %1277 = vmatpush.bf16.msra.mxu0 %v1041
        %1278 = vmatpush.bf16.msra.mxu0 %v1040
        %1279 = vmatpush.bf16.msra.mxu0 %v1039
        %1280 = vmatpush.bf16.msra.mxu0 %v1038
        %1281 = vmatmul.bf16.gmra.mxu0 %v681
        %v1282 = vpop.f32.mrf.mxu0
        %v1283 = vadd.f32 %v1234, %v1282
        %v1284 = vpop.f32.mrf.mxu0
        %v1285 = vadd.f32 %v1236, %v1284
        %1286 = vmatmul.bf16.gmra.mxu0 %v688
        %v1287 = vpop.f32.mrf.mxu0
        %v1288 = vadd.f32 %v1239, %v1287
        %v1289 = vpop.f32.mrf.mxu0
        %v1290 = vadd.f32 %v1241, %v1289
        %1291 = vmatmul.bf16.gmra.mxu0 %v695
        %v1292 = vpop.f32.mrf.mxu0
        %v1293 = vadd.f32 %v1244, %v1292
        %v1294 = vpop.f32.mrf.mxu0
        %v1295 = vadd.f32 %v1246, %v1294
        %1296 = vmatmul.bf16.gmra.mxu0 %v702
        %v1297 = vpop.f32.mrf.mxu0
        %v1298 = vadd.f32 %v1249, %v1297
        %v1299 = vpop.f32.mrf.mxu0
        %v1300 = vadd.f32 %v1251, %v1299
        %1301 = vmatmul.bf16.gmra.mxu0 %v709
        %v1302 = vpop.f32.mrf.mxu0
        %v1303 = vadd.f32 %v1254, %v1302
        %v1304 = vpop.f32.mrf.mxu0
        %v1305 = vadd.f32 %v1256, %v1304
        %1306 = vmatmul.bf16.gmra.mxu0 %v716
        %v1307 = vpop.f32.mrf.mxu0
        %v1308 = vadd.f32 %v1259, %v1307
        %v1309 = vpop.f32.mrf.mxu0
        %v1310 = vadd.f32 %v1261, %v1309
        %1311 = vmatmul.bf16.gmra.mxu0 %v723
        %v1312 = vpop.f32.mrf.mxu0
        %v1313 = vadd.f32 %v1264, %v1312
        %v1314 = vpop.f32.mrf.mxu0
        %v1315 = vadd.f32 %v1266, %v1314
        %1316 = vmatmul.bf16.gmra.mxu0 %v730
        %v1317 = vpop.f32.mrf.mxu0
        %v1318 = vadd.f32 %v1269, %v1317
        %v1319 = vpop.f32.mrf.mxu0
        %v1320 = vadd.f32 %v1271, %v1319
        %1321 = vdwg.mxu0
        %1322 = vmatpush.bf16.msra.mxu0 %v1053
        %1323 = vmatpush.bf16.msra.mxu0 %v1052
        %1324 = vmatpush.bf16.msra.mxu0 %v1051
        %1325 = vmatpush.bf16.msra.mxu0 %v1050
        %1326 = vmatpush.bf16.msra.mxu0 %v1049
        %1327 = vmatpush.bf16.msra.mxu0 %v1048
        %1328 = vmatpush.bf16.msra.mxu0 %v1047
        %1329 = vmatpush.bf16.msra.mxu0 %v1046
        %1330 = vmatmul.bf16.gmra.mxu0 %v682
        %v1331 = vpop.f32.mrf.mxu0
        %v1332 = vadd.f32 %v1283, %v1331
        %v1333 = vpop.f32.mrf.mxu0
        %v1334 = vadd.f32 %v1285, %v1333
        %1335 = vmatmul.bf16.gmra.mxu0 %v689
        %v1336 = vpop.f32.mrf.mxu0
        %v1337 = vadd.f32 %v1288, %v1336
        %v1338 = vpop.f32.mrf.mxu0
        %v1339 = vadd.f32 %v1290, %v1338
        %1340 = vmatmul.bf16.gmra.mxu0 %v696
        %v1341 = vpop.f32.mrf.mxu0
        %v1342 = vadd.f32 %v1293, %v1341
        %v1343 = vpop.f32.mrf.mxu0
        %v1344 = vadd.f32 %v1295, %v1343
        %1345 = vmatmul.bf16.gmra.mxu0 %v703
        %v1346 = vpop.f32.mrf.mxu0
        %v1347 = vadd.f32 %v1298, %v1346
        %v1348 = vpop.f32.mrf.mxu0
        %v1349 = vadd.f32 %v1300, %v1348
        %1350 = vmatmul.bf16.gmra.mxu0 %v710
        %v1351 = vpop.f32.mrf.mxu0
        %v1352 = vadd.f32 %v1303, %v1351
        %v1353 = vpop.f32.mrf.mxu0
        %v1354 = vadd.f32 %v1305, %v1353
        %1355 = vmatmul.bf16.gmra.mxu0 %v717
        %v1356 = vpop.f32.mrf.mxu0
        %v1357 = vadd.f32 %v1308, %v1356
        %v1358 = vpop.f32.mrf.mxu0
        %v1359 = vadd.f32 %v1310, %v1358
        %1360 = vmatmul.bf16.gmra.mxu0 %v724
        %v1361 = vpop.f32.mrf.mxu0
        %v1362 = vadd.f32 %v1313, %v1361
        %v1363 = vpop.f32.mrf.mxu0
        %v1364 = vadd.f32 %v1315, %v1363
        %1365 = vmatmul.bf16.gmra.mxu0 %v731
        %v1366 = vpop.f32.mrf.mxu0
        %v1367 = vadd.f32 %v1318, %v1366
        %v1368 = vpop.f32.mrf.mxu0
        %v1369 = vadd.f32 %v1320, %v1368
        %1370 = vdwg.mxu0
        %1371 = vmatpush.bf16.msra.mxu0 %v1061
        %1372 = vmatpush.bf16.msra.mxu0 %v1060
        %1373 = vmatpush.bf16.msra.mxu0 %v1059
        %1374 = vmatpush.bf16.msra.mxu0 %v1058
        %1375 = vmatpush.bf16.msra.mxu0 %v1057
        %1376 = vmatpush.bf16.msra.mxu0 %v1056
        %1377 = vmatpush.bf16.msra.mxu0 %v1055
        %1378 = vmatpush.bf16.msra.mxu0 %v1054
        %1379 = vmatmul.bf16.gmra.mxu0 %v683
        %v1380 = vpop.f32.mrf.mxu0
        %v1381 = vadd.f32 %v1332, %v1380
        %v1382 = vpop.f32.mrf.mxu0
        %v1383 = vadd.f32 %v1334, %v1382
        %1384 = vmatmul.bf16.gmra.mxu0 %v690
        %v1385 = vpop.f32.mrf.mxu0
        %v1386 = vadd.f32 %v1337, %v1385
        %v1387 = vpop.f32.mrf.mxu0
        %v1388 = vadd.f32 %v1339, %v1387
        %1389 = vmatmul.bf16.gmra.mxu0 %v697
        %v1390 = vpop.f32.mrf.mxu0
        %v1391 = vadd.f32 %v1342, %v1390
        %v1392 = vpop.f32.mrf.mxu0
        %v1393 = vadd.f32 %v1344, %v1392
        %1394 = vmatmul.bf16.gmra.mxu0 %v704
        %v1395 = vpop.f32.mrf.mxu0
        %v1396 = vadd.f32 %v1347, %v1395
        %v1397 = vpop.f32.mrf.mxu0
        %v1398 = vadd.f32 %v1349, %v1397
        %1399 = vmatmul.bf16.gmra.mxu0 %v711
        %v1400 = vpop.f32.mrf.mxu0
        %v1401 = vadd.f32 %v1352, %v1400
        %v1402 = vpop.f32.mrf.mxu0
        %v1403 = vadd.f32 %v1354, %v1402
        %1404 = vmatmul.bf16.gmra.mxu0 %v718
        %v1405 = vpop.f32.mrf.mxu0
        %v1406 = vadd.f32 %v1357, %v1405
        %v1407 = vpop.f32.mrf.mxu0
        %v1408 = vadd.f32 %v1359, %v1407
        %1409 = vmatmul.bf16.gmra.mxu0 %v725
        %v1410 = vpop.f32.mrf.mxu0
        %v1411 = vadd.f32 %v1362, %v1410
        %v1412 = vpop.f32.mrf.mxu0
        %v1413 = vadd.f32 %v1364, %v1412
        %1414 = vmatmul.bf16.gmra.mxu0 %v732
        %v1415 = vpop.f32.mrf.mxu0
        %v1416 = vadd.f32 %v1367, %v1415
        %v1417 = vpop.f32.mrf.mxu0
        %v1418 = vadd.f32 %v1369, %v1417
        %1419 = vdwg.mxu0
        %1420 = vmatpush.bf16.msra.mxu0 %v1069
        %1421 = vmatpush.bf16.msra.mxu0 %v1068
        %1422 = vmatpush.bf16.msra.mxu0 %v1067
        %1423 = vmatpush.bf16.msra.mxu0 %v1066
        %1424 = vmatpush.bf16.msra.mxu0 %v1065
        %1425 = vmatpush.bf16.msra.mxu0 %v1064
        %1426 = vmatpush.bf16.msra.mxu0 %v1063
        %1427 = vmatpush.bf16.msra.mxu0 %v1062
        %1428 = vmatmul.bf16.gmra.mxu0 %v684
        %v1429 = vpop.f32.mrf.mxu0
        %v1430 = vadd.f32 %v1381, %v1429
        %v1431 = vpop.f32.mrf.mxu0
        %v1432 = vadd.f32 %v1383, %v1431
        %1433 = vmatmul.bf16.gmra.mxu0 %v691
        %v1434 = vpop.f32.mrf.mxu0
        %v1435 = vadd.f32 %v1386, %v1434
        %v1436 = vpop.f32.mrf.mxu0
        %v1437 = vadd.f32 %v1388, %v1436
        %1438 = vmatmul.bf16.gmra.mxu0 %v698
        %v1439 = vpop.f32.mrf.mxu0
        %v1440 = vadd.f32 %v1391, %v1439
        %v1441 = vpop.f32.mrf.mxu0
        %v1442 = vadd.f32 %v1393, %v1441
        %1443 = vmatmul.bf16.gmra.mxu0 %v705
        %v1444 = vpop.f32.mrf.mxu0
        %v1445 = vadd.f32 %v1396, %v1444
        %v1446 = vpop.f32.mrf.mxu0
        %v1447 = vadd.f32 %v1398, %v1446
        %1448 = vmatmul.bf16.gmra.mxu0 %v712
        %v1449 = vpop.f32.mrf.mxu0
        %v1450 = vadd.f32 %v1401, %v1449
        %v1451 = vpop.f32.mrf.mxu0
        %v1452 = vadd.f32 %v1403, %v1451
        %1453 = vmatmul.bf16.gmra.mxu0 %v719
        %v1454 = vpop.f32.mrf.mxu0
        %v1455 = vadd.f32 %v1406, %v1454
        %v1456 = vpop.f32.mrf.mxu0
        %v1457 = vadd.f32 %v1408, %v1456
        %1458 = vmatmul.bf16.gmra.mxu0 %v726
        %v1459 = vpop.f32.mrf.mxu0
        %v1460 = vadd.f32 %v1411, %v1459
        %v1461 = vpop.f32.mrf.mxu0
        %v1462 = vadd.f32 %v1413, %v1461
        %1463 = vmatmul.bf16.gmra.mxu0 %v733
        %v1464 = vpop.f32.mrf.mxu0
        %v1465 = vadd.f32 %v1416, %v1464
        %v1466 = vpop.f32.mrf.mxu0
        %v1467 = vadd.f32 %v1418, %v1466
        %1468 = vdwg.mxu0
        %v1469 = vpack.c.bf16 %v1432, %v1430
        %v1470 = vpack.c.bf16 %v1437, %v1435
        %v1471 = vpack.c.bf16 %v1442, %v1440
        %v1472 = vpack.c.bf16 %v1447, %v1445
        %v1473 = vpack.c.bf16 %v1452, %v1450
        %v1474 = vpack.c.bf16 %v1457, %v1455
        %v1475 = vpack.c.bf16 %v1462, %v1460
        %v1476 = vpack.c.bf16 %v1467, %v1465
        %v1477 = vld [vmem:[%s3] sm:$0xf]
        %v1478 = vld [vmem:[%s3 + $0x4] sm:$0xf]
        %v1479 = vld [vmem:[%s3 + $0x8] sm:$0xf]
        %v1480 = vld [vmem:[%s3 + $0xc] sm:$0xf]
        %v1481 = vld [vmem:[%s3 + $0x10] sm:$0xf]
        %v1482 = vld [vmem:[%s3 + $0x14] sm:$0xf]
        %v1483 = vld [vmem:[%s3 + $0x18] sm:$0xf]
        %v1484 = vld [vmem:[%s3 + $0x1c] sm:$0xf]
        %v1485 = vld [vmem:[%s3 + $0x20] sm:$0xf]
        %v1486 = vld [vmem:[%s3 + $0x24] sm:$0xf]
        %v1487 = vld [vmem:[%s3 + $0x28] sm:$0xf]
        %v1488 = vld [vmem:[%s3 + $0x2c] sm:$0xf]
        %v1489 = vld [vmem:[%s3 + $0x30] sm:$0xf]
        %v1490 = vld [vmem:[%s3 + $0x34] sm:$0xf]
        %v1491 = vld [vmem:[%s3 + $0x38] sm:$0xf]
        %v1492 = vld [vmem:[%s3 + $0x3c] sm:$0xf]
        %v1493 = vld [vmem:[%s4] sm:$0x1]
        %v1495 = vperm.slane %v1493, 0
        %v1513 = vunpack.c.l.b16 %v1477
        %v1514 = vunpack.c.l.b16 %v1478
        %v1515 = vunpack.c.l.b16 %v1479
        %v1516 = vunpack.c.l.b16 %v1480
        %v1517 = vunpack.c.l.b16 %v1481
        %v1518 = vunpack.c.l.b16 %v1482
        %v1519 = vunpack.c.l.b16 %v1483
        %v1520 = vunpack.c.l.b16 %v1484
        %v1521 = vunpack.c.l.b16 %v1485
        %v1522 = vunpack.c.l.b16 %v1486
        %v1523 = vunpack.c.l.b16 %v1487
        %v1524 = vunpack.c.l.b16 %v1488
        %v1525 = vunpack.c.l.b16 %v1489
        %v1526 = vunpack.c.l.b16 %v1490
        %v1527 = vunpack.c.l.b16 %v1491
        %v1528 = vunpack.c.l.b16 %v1492
        %v1529 = vpack.c.b16 %v1514, %v1513
        %v1530 = vpack.c.b16 %v1516, %v1515
        %v1531 = vpack.c.b16 %v1518, %v1517
        %v1532 = vpack.c.b16 %v1520, %v1519
        %v1533 = vpack.c.b16 %v1522, %v1521
        %v1534 = vpack.c.b16 %v1524, %v1523
        %v1535 = vpack.c.b16 %v1526, %v1525
        %v1536 = vpack.c.b16 %v1528, %v1527
        %1545 = vmatpush.bf16.msra.mxu0 %v1536
        %1546 = vmatpush.bf16.msra.mxu0 %v1535
        %1547 = vmatpush.bf16.msra.mxu0 %v1534
        %1548 = vmatpush.bf16.msra.mxu0 %v1533
        %1549 = vmatpush.bf16.msra.mxu0 %v1532
        %1550 = vmatpush.bf16.msra.mxu0 %v1531
        %1551 = vmatpush.bf16.msra.mxu0 %v1530
        %1552 = vmatpush.bf16.msra.mxu0 %v1529
        %1553 = vmatmul.bf16.gmra.mxu0 %v1469
        %v1554 = vpop.f32.mrf.mxu0
        %v1555 = vadd.f32 %v1495, %v1554
        %v1556 = vpop.f32.mrf.mxu0
        %v1557 = vadd.f32 %v1495, %v1556
        %1558 = vmatmul.bf16.gmra.mxu0 %v1470
        %v1559 = vpop.f32.mrf.mxu0
        %v1560 = vadd.f32 %v1495, %v1559
        %v1561 = vpop.f32.mrf.mxu0
        %v1562 = vadd.f32 %v1495, %v1561
        %1563 = vmatmul.bf16.gmra.mxu0 %v1471
        %v1564 = vpop.f32.mrf.mxu0
        %v1565 = vadd.f32 %v1495, %v1564
        %v1566 = vpop.f32.mrf.mxu0
        %v1567 = vadd.f32 %v1495, %v1566
        %1568 = vmatmul.bf16.gmra.mxu0 %v1472
        %v1569 = vpop.f32.mrf.mxu0
        %v1570 = vadd.f32 %v1495, %v1569
        %v1571 = vpop.f32.mrf.mxu0
        %v1572 = vadd.f32 %v1495, %v1571
        %1573 = vmatmul.bf16.gmra.mxu0 %v1473
        %v1574 = vpop.f32.mrf.mxu0
        %v1575 = vadd.f32 %v1495, %v1574
        %v1576 = vpop.f32.mrf.mxu0
        %v1577 = vadd.f32 %v1495, %v1576
        %1578 = vmatmul.bf16.gmra.mxu0 %v1474
        %v1579 = vpop.f32.mrf.mxu0
        %v1580 = vadd.f32 %v1495, %v1579
        %v1581 = vpop.f32.mrf.mxu0
        %v1582 = vadd.f32 %v1495, %v1581
        %1583 = vmatmul.bf16.gmra.mxu0 %v1475
        %v1584 = vpop.f32.mrf.mxu0
        %v1585 = vadd.f32 %v1495, %v1584
        %v1586 = vpop.f32.mrf.mxu0
        %v1587 = vadd.f32 %v1495, %v1586
        %1588 = vmatmul.bf16.gmra.mxu0 %v1476
        %v1589 = vpop.f32.mrf.mxu0
        %v1590 = vadd.f32 %v1495, %v1589
        %v1591 = vpop.f32.mrf.mxu0
        %v1592 = vadd.f32 %v1495, %v1591
        %1593 = vdwg.mxu0
        %v1594 = vmax.f32 %v1555, 0.0
        %v1595 = vmax.f32 %v1557, 0.0
        %v1596 = vmax.f32 %v1560, 0.0
        %v1597 = vmax.f32 %v1562, 0.0
        %v1598 = vmax.f32 %v1565, 0.0
        %v1599 = vmax.f32 %v1567, 0.0
        %v1600 = vmax.f32 %v1570, 0.0
        %v1601 = vmax.f32 %v1572, 0.0
        %v1602 = vmax.f32 %v1575, 0.0
        %v1603 = vmax.f32 %v1577, 0.0
        %v1604 = vmax.f32 %v1580, 0.0
        %v1605 = vmax.f32 %v1582, 0.0
        %v1606 = vmax.f32 %v1585, 0.0
        %v1607 = vmax.f32 %v1587, 0.0
        %v1608 = vmax.f32 %v1590, 0.0
        %v1609 = vmax.f32 %v1592, 0.0
        %v1610 = vpack.c.bf16 %v1595, %v1594
        %v1611 = vpack.c.bf16 %v1597, %v1596
        %v1612 = vpack.c.bf16 %v1599, %v1598
        %v1613 = vpack.c.bf16 %v1601, %v1600
        %v1614 = vpack.c.bf16 %v1603, %v1602
        %v1615 = vpack.c.bf16 %v1605, %v1604
        %v1616 = vpack.c.bf16 %v1607, %v1606
        %v1617 = vpack.c.bf16 %v1609, %v1608
        %v1618 = vld [vmem:[%s5] sm:$0xf]
        %v1619 = vld [vmem:[%s5 + $0x4] sm:$0xf]
        %v1620 = vld [vmem:[%s5 + $0x8] sm:$0xf]
        %v1621 = vld [vmem:[%s5 + $0xc] sm:$0xf]
        %v1622 = vld [vmem:[%s5 + $0x10] sm:$0xf]
        %v1623 = vld [vmem:[%s5 + $0x14] sm:$0xf]
        %v1624 = vld [vmem:[%s5 + $0x18] sm:$0xf]
        %v1625 = vld [vmem:[%s5 + $0x1c] sm:$0xf]
        %v1626 = vld [vmem:[%s6] sm:$0x1]
        %v1628 = vperm.slane %v1626, 0
        %v1638 = vunpack.c.l.b16 %v1618
        %v1639 = vunpack.c.l.b16 %v1619
        %v1640 = vunpack.c.l.b16 %v1620
        %v1641 = vunpack.c.l.b16 %v1621
        %v1642 = vunpack.c.l.b16 %v1622
        %v1643 = vunpack.c.l.b16 %v1623
        %v1644 = vunpack.c.l.b16 %v1624
        %v1645 = vunpack.c.l.b16 %v1625
        %v1646 = vpack.c.b16 %v1639, %v1638
        %v1647 = vpack.c.b16 %v1641, %v1640
        %v1648 = vpack.c.b16 %v1643, %v1642
        %v1649 = vpack.c.b16 %v1645, %v1644
        %vm1654 = vcmask 523264
        %v1656 = vsel %vm1654, %v1610, 0
        %v1659 = vsel %vm1654, %v1611, 0
        %v1662 = vsel %vm1654, %v1612, 0
        %v1665 = vsel %vm1654, %v1613, 0
        %v1668 = vsel %vm1654, %v1614, 0
        %v1671 = vsel %vm1654, %v1615, 0
        %v1674 = vsel %vm1654, %v1616, 0
        %v1677 = vsel %vm1654, %v1617, 0
        %1679 = vmatpush.bf16.msra.mxu0 0
        %1680 = vmatpush.bf16.msra.mxu0 0
        %1681 = vmatpush.bf16.msra.mxu0 0
        %1682 = vmatpush.bf16.msra.mxu0 0
        %1683 = vmatpush.bf16.msra.mxu0 %v1649
        %1684 = vmatpush.bf16.msra.mxu0 %v1648
        %1685 = vmatpush.bf16.msra.mxu0 %v1647
        %1686 = vmatpush.bf16.msra.mxu0 %v1646
        %1687 = vmatmul.bf16.gmra.mxu0 %v1656
        %v1688 = vpop.f32.mrf.mxu0
        %v1689 = vadd.f32 %v1628, %v1688
        %v1690 = vpop.f32.mrf.mxu0
        %v1691 = vadd.f32 %v1628, %v1690
        %1692 = vmatmul.bf16.gmra.mxu0 %v1659
        %v1693 = vpop.f32.mrf.mxu0
        %v1694 = vadd.f32 %v1628, %v1693
        %v1695 = vpop.f32.mrf.mxu0
        %v1696 = vadd.f32 %v1628, %v1695
        %1697 = vmatmul.bf16.gmra.mxu0 %v1662
        %v1698 = vpop.f32.mrf.mxu0
        %v1699 = vadd.f32 %v1628, %v1698
        %v1700 = vpop.f32.mrf.mxu0
        %v1701 = vadd.f32 %v1628, %v1700
        %1702 = vmatmul.bf16.gmra.mxu0 %v1665
        %v1703 = vpop.f32.mrf.mxu0
        %v1704 = vadd.f32 %v1628, %v1703
        %v1705 = vpop.f32.mrf.mxu0
        %v1706 = vadd.f32 %v1628, %v1705
        %1707 = vmatmul.bf16.gmra.mxu0 %v1668
        %v1708 = vpop.f32.mrf.mxu0
        %v1709 = vadd.f32 %v1628, %v1708
        %v1710 = vpop.f32.mrf.mxu0
        %v1711 = vadd.f32 %v1628, %v1710
        %1712 = vmatmul.bf16.gmra.mxu0 %v1671
        %v1713 = vpop.f32.mrf.mxu0
        %v1714 = vadd.f32 %v1628, %v1713
        %v1715 = vpop.f32.mrf.mxu0
        %v1716 = vadd.f32 %v1628, %v1715
        %1717 = vmatmul.bf16.gmra.mxu0 %v1674
        %v1718 = vpop.f32.mrf.mxu0
        %v1719 = vadd.f32 %v1628, %v1718
        %v1720 = vpop.f32.mrf.mxu0
        %v1721 = vadd.f32 %v1628, %v1720
        %1722 = vmatmul.bf16.gmra.mxu0 %v1677
        %v1723 = vpop.f32.mrf.mxu0
        %v1724 = vadd.f32 %v1628, %v1723
        %v1725 = vpop.f32.mrf.mxu0
        %v1726 = vadd.f32 %v1628, %v1725
        %1727 = vdwg.mxu0
        %vm1728 = vcmask 80896
        %v1729 = vsel %vm1728, %v1689, -inf
        %1730 = vmax.xlane.f32.xlu0 %v1729
        %v1731 = vpop.xlane.xlu0 %1730
        %v1732 = vsel %vm1728, %v1691, -inf
        %1733 = vmax.xlane.f32.xlu0 %v1732
        %v1734 = vpop.xlane.xlu0 %1733
        %v1735 = vsel %vm1728, %v1694, -inf
        %1736 = vmax.xlane.f32.xlu0 %v1735
        %v1737 = vpop.xlane.xlu0 %1736
        %v1738 = vsel %vm1728, %v1696, -inf
        %1739 = vmax.xlane.f32.xlu0 %v1738
        %v1740 = vpop.xlane.xlu0 %1739
        %v1741 = vsel %vm1728, %v1699, -inf
        %1742 = vmax.xlane.f32.xlu0 %v1741
        %v1743 = vpop.xlane.xlu0 %1742
        %v1744 = vsel %vm1728, %v1701, -inf
        %1745 = vmax.xlane.f32.xlu0 %v1744
        %v1746 = vpop.xlane.xlu0 %1745
        %v1747 = vsel %vm1728, %v1704, -inf
        %1748 = vmax.xlane.f32.xlu0 %v1747
        %v1749 = vpop.xlane.xlu0 %1748
        %v1750 = vsel %vm1728, %v1706, -inf
        %1751 = vmax.xlane.f32.xlu0 %v1750
        %v1752 = vpop.xlane.xlu0 %1751
        %v1753 = vsel %vm1728, %v1709, -inf
        %1754 = vmax.xlane.f32.xlu0 %v1753
        %v1755 = vpop.xlane.xlu0 %1754
        %v1756 = vsel %vm1728, %v1711, -inf
        %1757 = vmax.xlane.f32.xlu0 %v1756
        %v1758 = vpop.xlane.xlu0 %1757
        %v1759 = vsel %vm1728, %v1714, -inf
        %1760 = vmax.xlane.f32.xlu0 %v1759
        %v1761 = vpop.xlane.xlu0 %1760
        %v1762 = vsel %vm1728, %v1716, -inf
        %1763 = vmax.xlane.f32.xlu0 %v1762
        %v1764 = vpop.xlane.xlu0 %1763
        %v1765 = vsel %vm1728, %v1719, -inf
        %1766 = vmax.xlane.f32.xlu0 %v1765
        %v1767 = vpop.xlane.xlu0 %1766
        %v1768 = vsel %vm1728, %v1721, -inf
        %1769 = vmax.xlane.f32.xlu0 %v1768
        %v1770 = vpop.xlane.xlu0 %1769
        %v1771 = vsel %vm1728, %v1724, -inf
        %1772 = vmax.xlane.f32.xlu0 %v1771
        %v1773 = vpop.xlane.xlu0 %1772
        %v1774 = vsel %vm1728, %v1726, -inf
        %1775 = vmax.xlane.f32.xlu0 %v1774
        %v1776 = vpop.xlane.xlu0 %1775
        %v1777 = vsub.f32 %v1689, %v1731
        %v1778 = vsub.f32 %v1691, %v1734
        %v1779 = vsub.f32 %v1694, %v1737
        %v1780 = vsub.f32 %v1696, %v1740
        %v1781 = vsub.f32 %v1699, %v1743
        %v1782 = vsub.f32 %v1701, %v1746
        %v1783 = vsub.f32 %v1704, %v1749
        %v1784 = vsub.f32 %v1706, %v1752
        %v1785 = vsub.f32 %v1709, %v1755
        %v1786 = vsub.f32 %v1711, %v1758
        %v1787 = vsub.f32 %v1714, %v1761
        %v1788 = vsub.f32 %v1716, %v1764
        %v1789 = vsub.f32 %v1719, %v1767
        %v1790 = vsub.f32 %v1721, %v1770
        %v1791 = vsub.f32 %v1724, %v1773
        %v1792 = vsub.f32 %v1726, %v1776
        %v1793 = vmul.f32 %v1777, 1.442695
        %v1794 = vpow.pop %v1793
        %v1795 = vmul.f32 %v1778, 1.442695
        %v1796 = vpow.pop %v1795
        %v1797 = vmul.f32 %v1779, 1.442695
        %v1798 = vpow.pop %v1797
        %v1799 = vmul.f32 %v1780, 1.442695
        %v1800 = vpow.pop %v1799
        %v1801 = vmul.f32 %v1781, 1.442695
        %v1802 = vpow.pop %v1801
        %v1803 = vmul.f32 %v1782, 1.442695
        %v1804 = vpow.pop %v1803
        %v1805 = vmul.f32 %v1783, 1.442695
        %v1806 = vpow.pop %v1805
        %v1807 = vmul.f32 %v1784, 1.442695
        %v1808 = vpow.pop %v1807
        %v1809 = vmul.f32 %v1785, 1.442695
        %v1810 = vpow.pop %v1809
        %v1811 = vmul.f32 %v1786, 1.442695
        %v1812 = vpow.pop %v1811
        %v1813 = vmul.f32 %v1787, 1.442695
        %v1814 = vpow.pop %v1813
        %v1815 = vmul.f32 %v1788, 1.442695
        %v1816 = vpow.pop %v1815
        %v1817 = vmul.f32 %v1789, 1.442695
        %v1818 = vpow.pop %v1817
        %v1819 = vmul.f32 %v1790, 1.442695
        %v1820 = vpow.pop %v1819
        %v1821 = vmul.f32 %v1791, 1.442695
        %v1822 = vpow.pop %v1821
        %v1823 = vmul.f32 %v1792, 1.442695
        %v1824 = vpow.pop %v1823
        %v1825 = vsel %vm1728, %v1794, 0.0
        %1826 = vadd.xlane.f32.xlu0 %v1825
        %v1827 = vpop.xlane.xlu0 %1826
        %v1828 = vsel %vm1728, %v1796, 0.0
        %1829 = vadd.xlane.f32.xlu0 %v1828
        %v1830 = vpop.xlane.xlu0 %1829
        %v1831 = vsel %vm1728, %v1798, 0.0
        %1832 = vadd.xlane.f32.xlu0 %v1831
        %v1833 = vpop.xlane.xlu0 %1832
        %v1834 = vsel %vm1728, %v1800, 0.0
        %1835 = vadd.xlane.f32.xlu0 %v1834
        %v1836 = vpop.xlane.xlu0 %1835
        %v1837 = vsel %vm1728, %v1802, 0.0
        %1838 = vadd.xlane.f32.xlu0 %v1837
        %v1839 = vpop.xlane.xlu0 %1838
        %v1840 = vsel %vm1728, %v1804, 0.0
        %1841 = vadd.xlane.f32.xlu0 %v1840
        %v1842 = vpop.xlane.xlu0 %1841
        %v1843 = vsel %vm1728, %v1806, 0.0
        %1844 = vadd.xlane.f32.xlu0 %v1843
        %v1845 = vpop.xlane.xlu0 %1844
        %v1846 = vsel %vm1728, %v1808, 0.0
        %1847 = vadd.xlane.f32.xlu0 %v1846
        %v1848 = vpop.xlane.xlu0 %1847
        %v1849 = vsel %vm1728, %v1810, 0.0
        %1850 = vadd.xlane.f32.xlu0 %v1849
        %v1851 = vpop.xlane.xlu0 %1850
        %v1852 = vsel %vm1728, %v1812, 0.0
        %1853 = vadd.xlane.f32.xlu0 %v1852
        %v1854 = vpop.xlane.xlu0 %1853
        %v1855 = vsel %vm1728, %v1814, 0.0
        %1856 = vadd.xlane.f32.xlu0 %v1855
        %v1857 = vpop.xlane.xlu0 %1856
        %v1858 = vsel %vm1728, %v1816, 0.0
        %1859 = vadd.xlane.f32.xlu0 %v1858
        %v1860 = vpop.xlane.xlu0 %1859
        %v1861 = vsel %vm1728, %v1818, 0.0
        %1862 = vadd.xlane.f32.xlu0 %v1861
        %v1863 = vpop.xlane.xlu0 %1862
        %v1864 = vsel %vm1728, %v1820, 0.0
        %1865 = vadd.xlane.f32.xlu0 %v1864
        %v1866 = vpop.xlane.xlu0 %1865
        %v1867 = vsel %vm1728, %v1822, 0.0
        %1868 = vadd.xlane.f32.xlu0 %v1867
        %v1869 = vpop.xlane.xlu0 %1868
        %v1870 = vsel %vm1728, %v1824, 0.0
        %1871 = vadd.xlane.f32.xlu0 %v1870
        %v1872 = vpop.xlane.xlu0 %1871
        %v1873 = vrcp.pop %v1827
        %v1874 = vmul.f32 %v1827, %v1873
        %v1875 = vsub.f32 1.0, %v1874
        %v1876 = vmul.f32 %v1873, %v1875
        %v1877 = vadd.f32 %v1873, %v1876
        %vm1878 = vweird.f32 %v1827
        %vm1879 = vweird.f32 %v1873
        %vm1880 = vmor %vm1878, %vm1879
        %v1881 = vsel %vm1880, %v1873, %v1877
        %v1882 = vand.u32 2147483647, %v1827
        %vm1883 = vcmp.eq.f32.partialorder %v1882, 8.507059e+37
        %v1884 = vand.u32 %v1827, 2147483648
        %v1885 = vor.u32 1.1754944e-38, %v1884
        %v1886 = vsel %vm1883, %v1885, %v1881
        %v1887 = vrcp.pop %v1830
        %v1888 = vmul.f32 %v1830, %v1887
        %v1889 = vsub.f32 1.0, %v1888
        %v1890 = vmul.f32 %v1887, %v1889
        %v1891 = vadd.f32 %v1887, %v1890
        %vm1892 = vweird.f32 %v1830
        %vm1893 = vweird.f32 %v1887
        %vm1894 = vmor %vm1892, %vm1893
        %v1895 = vsel %vm1894, %v1887, %v1891
        %v1896 = vand.u32 2147483647, %v1830
        %vm1897 = vcmp.eq.f32.partialorder %v1896, 8.507059e+37
        %v1898 = vand.u32 %v1830, 2147483648
        %v1899 = vor.u32 1.1754944e-38, %v1898
        %v1900 = vsel %vm1897, %v1899, %v1895
        %v1901 = vrcp.pop %v1833
        %v1902 = vmul.f32 %v1833, %v1901
        %v1903 = vsub.f32 1.0, %v1902
        %v1904 = vmul.f32 %v1901, %v1903
        %v1905 = vadd.f32 %v1901, %v1904
        %vm1906 = vweird.f32 %v1833
        %vm1907 = vweird.f32 %v1901
        %vm1908 = vmor %vm1906, %vm1907
        %v1909 = vsel %vm1908, %v1901, %v1905
        %v1910 = vand.u32 2147483647, %v1833
        %vm1911 = vcmp.eq.f32.partialorder %v1910, 8.507059e+37
        %v1912 = vand.u32 %v1833, 2147483648
        %v1913 = vor.u32 1.1754944e-38, %v1912
        %v1914 = vsel %vm1911, %v1913, %v1909
        %v1915 = vrcp.pop %v1836
        %v1916 = vmul.f32 %v1836, %v1915
        %v1917 = vsub.f32 1.0, %v1916
        %v1918 = vmul.f32 %v1915, %v1917
        %v1919 = vadd.f32 %v1915, %v1918
        %vm1920 = vweird.f32 %v1836
        %vm1921 = vweird.f32 %v1915
        %vm1922 = vmor %vm1920, %vm1921
        %v1923 = vsel %vm1922, %v1915, %v1919
        %v1924 = vand.u32 2147483647, %v1836
        %vm1925 = vcmp.eq.f32.partialorder %v1924, 8.507059e+37
        %v1926 = vand.u32 %v1836, 2147483648
        %v1927 = vor.u32 1.1754944e-38, %v1926
        %v1928 = vsel %vm1925, %v1927, %v1923
        %v1929 = vrcp.pop %v1839
        %v1930 = vmul.f32 %v1839, %v1929
        %v1931 = vsub.f32 1.0, %v1930
        %v1932 = vmul.f32 %v1929, %v1931
        %v1933 = vadd.f32 %v1929, %v1932
        %vm1934 = vweird.f32 %v1839
        %vm1935 = vweird.f32 %v1929
        %vm1936 = vmor %vm1934, %vm1935
        %v1937 = vsel %vm1936, %v1929, %v1933
        %v1938 = vand.u32 2147483647, %v1839
        %vm1939 = vcmp.eq.f32.partialorder %v1938, 8.507059e+37
        %v1940 = vand.u32 %v1839, 2147483648
        %v1941 = vor.u32 1.1754944e-38, %v1940
        %v1942 = vsel %vm1939, %v1941, %v1937
        %v1943 = vrcp.pop %v1842
        %v1944 = vmul.f32 %v1842, %v1943
        %v1945 = vsub.f32 1.0, %v1944
        %v1946 = vmul.f32 %v1943, %v1945
        %v1947 = vadd.f32 %v1943, %v1946
        %vm1948 = vweird.f32 %v1842
        %vm1949 = vweird.f32 %v1943
        %vm1950 = vmor %vm1948, %vm1949
        %v1951 = vsel %vm1950, %v1943, %v1947
        %v1952 = vand.u32 2147483647, %v1842
        %vm1953 = vcmp.eq.f32.partialorder %v1952, 8.507059e+37
        %v1954 = vand.u32 %v1842, 2147483648
        %v1955 = vor.u32 1.1754944e-38, %v1954
        %v1956 = vsel %vm1953, %v1955, %v1951
        %v1957 = vrcp.pop %v1845
        %v1958 = vmul.f32 %v1845, %v1957
        %v1959 = vsub.f32 1.0, %v1958
        %v1960 = vmul.f32 %v1957, %v1959
        %v1961 = vadd.f32 %v1957, %v1960
        %vm1962 = vweird.f32 %v1845
        %vm1963 = vweird.f32 %v1957
        %vm1964 = vmor %vm1962, %vm1963
        %v1965 = vsel %vm1964, %v1957, %v1961
        %v1966 = vand.u32 2147483647, %v1845
        %vm1967 = vcmp.eq.f32.partialorder %v1966, 8.507059e+37
        %v1968 = vand.u32 %v1845, 2147483648
        %v1969 = vor.u32 1.1754944e-38, %v1968
        %v1970 = vsel %vm1967, %v1969, %v1965
        %v1971 = vrcp.pop %v1848
        %v1972 = vmul.f32 %v1848, %v1971
        %v1973 = vsub.f32 1.0, %v1972
        %v1974 = vmul.f32 %v1971, %v1973
        %v1975 = vadd.f32 %v1971, %v1974
        %vm1976 = vweird.f32 %v1848
        %vm1977 = vweird.f32 %v1971
        %vm1978 = vmor %vm1976, %vm1977
        %v1979 = vsel %vm1978, %v1971, %v1975
        %v1980 = vand.u32 2147483647, %v1848
        %vm1981 = vcmp.eq.f32.partialorder %v1980, 8.507059e+37
        %v1982 = vand.u32 %v1848, 2147483648
        %v1983 = vor.u32 1.1754944e-38, %v1982
        %v1984 = vsel %vm1981, %v1983, %v1979
        %v1985 = vrcp.pop %v1851
        %v1986 = vmul.f32 %v1851, %v1985
        %v1987 = vsub.f32 1.0, %v1986
        %v1988 = vmul.f32 %v1985, %v1987
        %v1989 = vadd.f32 %v1985, %v1988
        %vm1990 = vweird.f32 %v1851
        %vm1991 = vweird.f32 %v1985
        %vm1992 = vmor %vm1990, %vm1991
        %v1993 = vsel %vm1992, %v1985, %v1989
        %v1994 = vand.u32 2147483647, %v1851
        %vm1995 = vcmp.eq.f32.partialorder %v1994, 8.507059e+37
        %v1996 = vand.u32 %v1851, 2147483648
        %v1997 = vor.u32 1.1754944e-38, %v1996
        %v1998 = vsel %vm1995, %v1997, %v1993
        %v1999 = vrcp.pop %v1854
        %v2000 = vmul.f32 %v1854, %v1999
        %v2001 = vsub.f32 1.0, %v2000
        %v2002 = vmul.f32 %v1999, %v2001
        %v2003 = vadd.f32 %v1999, %v2002
        %vm2004 = vweird.f32 %v1854
        %vm2005 = vweird.f32 %v1999
        %vm2006 = vmor %vm2004, %vm2005
        %v2007 = vsel %vm2006, %v1999, %v2003
        %v2008 = vand.u32 2147483647, %v1854
        %vm2009 = vcmp.eq.f32.partialorder %v2008, 8.507059e+37
        %v2010 = vand.u32 %v1854, 2147483648
        %v2011 = vor.u32 1.1754944e-38, %v2010
        %v2012 = vsel %vm2009, %v2011, %v2007
        %v2013 = vrcp.pop %v1857
        %v2014 = vmul.f32 %v1857, %v2013
        %v2015 = vsub.f32 1.0, %v2014
        %v2016 = vmul.f32 %v2013, %v2015
        %v2017 = vadd.f32 %v2013, %v2016
        %vm2018 = vweird.f32 %v1857
        %vm2019 = vweird.f32 %v2013
        %vm2020 = vmor %vm2018, %vm2019
        %v2021 = vsel %vm2020, %v2013, %v2017
        %v2022 = vand.u32 2147483647, %v1857
        %vm2023 = vcmp.eq.f32.partialorder %v2022, 8.507059e+37
        %v2024 = vand.u32 %v1857, 2147483648
        %v2025 = vor.u32 1.1754944e-38, %v2024
        %v2026 = vsel %vm2023, %v2025, %v2021
        %v2027 = vrcp.pop %v1860
        %v2028 = vmul.f32 %v1860, %v2027
        %v2029 = vsub.f32 1.0, %v2028
        %v2030 = vmul.f32 %v2027, %v2029
        %v2031 = vadd.f32 %v2027, %v2030
        %vm2032 = vweird.f32 %v1860
        %vm2033 = vweird.f32 %v2027
        %vm2034 = vmor %vm2032, %vm2033
        %v2035 = vsel %vm2034, %v2027, %v2031
        %v2036 = vand.u32 2147483647, %v1860
        %vm2037 = vcmp.eq.f32.partialorder %v2036, 8.507059e+37
        %v2038 = vand.u32 %v1860, 2147483648
        %v2039 = vor.u32 1.1754944e-38, %v2038
        %v2040 = vsel %vm2037, %v2039, %v2035
        %v2041 = vrcp.pop %v1863
        %v2042 = vmul.f32 %v1863, %v2041
        %v2043 = vsub.f32 1.0, %v2042
        %v2044 = vmul.f32 %v2041, %v2043
        %v2045 = vadd.f32 %v2041, %v2044
        %vm2046 = vweird.f32 %v1863
        %vm2047 = vweird.f32 %v2041
        %vm2048 = vmor %vm2046, %vm2047
        %v2049 = vsel %vm2048, %v2041, %v2045
        %v2050 = vand.u32 2147483647, %v1863
        %vm2051 = vcmp.eq.f32.partialorder %v2050, 8.507059e+37
        %v2052 = vand.u32 %v1863, 2147483648
        %v2053 = vor.u32 1.1754944e-38, %v2052
        %v2054 = vsel %vm2051, %v2053, %v2049
        %v2055 = vrcp.pop %v1866
        %v2056 = vmul.f32 %v1866, %v2055
        %v2057 = vsub.f32 1.0, %v2056
        %v2058 = vmul.f32 %v2055, %v2057
        %v2059 = vadd.f32 %v2055, %v2058
        %vm2060 = vweird.f32 %v1866
        %vm2061 = vweird.f32 %v2055
        %vm2062 = vmor %vm2060, %vm2061
        %v2063 = vsel %vm2062, %v2055, %v2059
        %v2064 = vand.u32 2147483647, %v1866
        %vm2065 = vcmp.eq.f32.partialorder %v2064, 8.507059e+37
        %v2066 = vand.u32 %v1866, 2147483648
        %v2067 = vor.u32 1.1754944e-38, %v2066
        %v2068 = vsel %vm2065, %v2067, %v2063
        %v2069 = vrcp.pop %v1869
        %v2070 = vmul.f32 %v1869, %v2069
        %v2071 = vsub.f32 1.0, %v2070
        %v2072 = vmul.f32 %v2069, %v2071
        %v2073 = vadd.f32 %v2069, %v2072
        %vm2074 = vweird.f32 %v1869
        %vm2075 = vweird.f32 %v2069
        %vm2076 = vmor %vm2074, %vm2075
        %v2077 = vsel %vm2076, %v2069, %v2073
        %v2078 = vand.u32 2147483647, %v1869
        %vm2079 = vcmp.eq.f32.partialorder %v2078, 8.507059e+37
        %v2080 = vand.u32 %v1869, 2147483648
        %v2081 = vor.u32 1.1754944e-38, %v2080
        %v2082 = vsel %vm2079, %v2081, %v2077
        %v2083 = vrcp.pop %v1872
        %v2084 = vmul.f32 %v1872, %v2083
        %v2085 = vsub.f32 1.0, %v2084
        %v2086 = vmul.f32 %v2083, %v2085
        %v2087 = vadd.f32 %v2083, %v2086
        %vm2088 = vweird.f32 %v1872
        %vm2089 = vweird.f32 %v2083
        %vm2090 = vmor %vm2088, %vm2089
        %v2091 = vsel %vm2090, %v2083, %v2087
        %v2092 = vand.u32 2147483647, %v1872
        %vm2093 = vcmp.eq.f32.partialorder %v2092, 8.507059e+37
        %v2094 = vand.u32 %v1872, 2147483648
        %v2095 = vor.u32 1.1754944e-38, %v2094
        %v2096 = vsel %vm2093, %v2095, %v2091
        %v2097 = vmul.f32 %v1794, %v1886
        %v2098 = vmul.f32 %v1796, %v1900
        %v2099 = vmul.f32 %v1798, %v1914
        %v2100 = vmul.f32 %v1800, %v1928
        %v2101 = vmul.f32 %v1802, %v1942
        %v2102 = vmul.f32 %v1804, %v1956
        %v2103 = vmul.f32 %v1806, %v1970
        %v2104 = vmul.f32 %v1808, %v1984
        %v2105 = vmul.f32 %v1810, %v1998
        %v2106 = vmul.f32 %v1812, %v2012
        %v2107 = vmul.f32 %v1814, %v2026
        %v2108 = vmul.f32 %v1816, %v2040
        %v2109 = vmul.f32 %v1818, %v2054
        %v2110 = vmul.f32 %v1820, %v2068
        %v2111 = vmul.f32 %v1822, %v2082
        %v2112 = vmul.f32 %v1824, %v2096
        %2113 = vst.msk [vmem:[%s319] sm:$0xff] %vm1728, %v2097
        %2114 = vst.msk [vmem:[%s319 + $0x8] sm:$0xff] %vm1728, %v2098
        %2115 = vst.msk [vmem:[%s319 + $0x10] sm:$0xff] %vm1728, %v2099
        %2116 = vst.msk [vmem:[%s319 + $0x18] sm:$0xff] %vm1728, %v2100
        %2117 = vst.msk [vmem:[%s319 + $0x20] sm:$0xff] %vm1728, %v2101
        %2118 = vst.msk [vmem:[%s319 + $0x28] sm:$0xff] %vm1728, %v2102
        %2119 = vst.msk [vmem:[%s319 + $0x30] sm:$0xff] %vm1728, %v2103
        %2120 = vst.msk [vmem:[%s319 + $0x38] sm:$0xff] %vm1728, %v2104
        %2121 = vst.msk [vmem:[%s319 + $0x40] sm:$0xff] %vm1728, %v2105
        %2122 = vst.msk [vmem:[%s319 + $0x48] sm:$0xff] %vm1728, %v2106
        %2123 = vst.msk [vmem:[%s319 + $0x50] sm:$0xff] %vm1728, %v2107
        %2124 = vst.msk [vmem:[%s319 + $0x58] sm:$0xff] %vm1728, %v2108
        %2125 = vst.msk [vmem:[%s319 + $0x60] sm:$0xff] %vm1728, %v2109
        %2126 = vst.msk [vmem:[%s319 + $0x68] sm:$0xff] %vm1728, %v2110
        %2127 = vst.msk [vmem:[%s319 + $0x70] sm:$0xff] %vm1728, %v2111
        %2128 = vst.msk [vmem:[%s319 + $0x78] sm:$0xff] %vm1728, %v2112
        %s2129 = smul.u32 16, %s22
        %p2130 = scmp.lt.s32.totalorder %s2129, 31
        %s2131 = scalar_select %p2130, %s2129, 31
        %s2132 = smul.addr %s2131, 8
        %s2133 = scalar_lea.vmem %s7, %s2132
        // Predicated region
        $region57: #{tpu_custom_call.1} parent=47 // pred_check
          %p2134 = pneg %p192
        $region58: #{tpu_custom_call.1} parent=47 // pred_check_branch
          %2136 = sbr.rel (%p2134) target = $region60
        $region59: #{tpu_custom_call.1} parent=47 // pred_region
          %s2137 = smul.u32 16, %s22
        $region60: #{tpu_custom_call.1} parent=47 // pred_fallthru
          _
      $region48: #{tpu_custom_call.1} parent=5 // pred_fallthru
        _
      %p2138 = scmp.le.s32.totalorder 2, %s17
      // Predicated region
      $region61: #{tpu_custom_call.1} parent=5 // pred_check
        %p2139 = pneg %p2138
      $region62: #{tpu_custom_call.1} parent=5 // pred_check_branch
        %2141 = sbr.rel (%p2139) target = $region64
      $region63: #{tpu_custom_call.1} parent=5 // pred_region
        %s2142 = ssub.s32 %s17, 2
        // Predicated region
        $region65: #{tpu_custom_call.1} parent=63 // pred_check
          %p2143 = pneg %p198
        $region66: #{tpu_custom_call.1} parent=63 // pred_check_branch
          %2145 = sbr.rel (%p2143) target = $region68
        $region67: #{tpu_custom_call.1} parent=63 // pred_region
          %s2146 = smul.u32 16, %s23
          %p2147 = scmp.lt.s32.totalorder %s2146, 31
          %s2148 = scalar_select %p2147, %s2146, 31
          %s2149 = smul.addr %s2148, 8
          %s2150 = scalar_lea.vmem %s7, %s2149
        $region68: #{tpu_custom_call.1} parent=63 // pred_fallthru
          _
      $region64: #{tpu_custom_call.1} parent=5 // pred_fallthru
        _
    $region6: #{tpu_custom_call.1} parent=1 // loop_footer
      %s21 = sadd.s32 1, %s17
    $region7: #{tpu_custom_call.1} parent=1 // loop_footer_branch
      %16 = sbr.rel target = $region3
    $region8: #{tpu_custom_call.1} parent=1 // loop_exit
      _
    %2151 = vsyncpa [#allocation3], 1
    %s2152 = scalar_lea.sflag [#allocation3], 1
    %2153 = vsyncpa %s2152, 1
    %2154 = vsyncpa [#allocation5], 1

</llo_original>
